<compile_context>
chip_gen: v7x
topology: tpu7x:2x2x1
jax: 0.10.0
libtpu: 0.0.40
codegen_flags: <defaults>
</compile_context>

<pallas_src>
import functools

import jax
import jax.numpy as jnp
from jax.experimental import pallas as pl
from jax.experimental.pallas import tpu as pltpu

# -----------------------------------------------------------------------------
# Config (small shapes)
# -----------------------------------------------------------------------------
BATCH = 2
CIN = 4
HW = 16          # spatial (H == W == 16)
CCONV = 8        # stand-in for inception feature channels
KSIZE = 3
EMBED = 32
HIDDEN = 32
VOCAB = 64
NUM_LAYERS = 2
SEQ = 8          # caption length

B_PAD = 8                 # pad batch to 8 sublanes for every matmul / gate op
VOCAB_PAD = 128           # pad vocab lanes to 128 -> unmasked output stores
TP1 = SEQ + 1             # decoder sequence length (features row + SEQ rows)
H4 = 4 * HIDDEN           # per-layer gate width (128)
H8 = 8 * HIDDEN           # packed two-layer gate width (256)


# -----------------------------------------------------------------------------
# Fused kernel
# -----------------------------------------------------------------------------
def cnn_to_rnn_kernel(patches_ref, convw_ref, convb_ref, fcw_ref, fcb_ref,
                      emb_ref, wih0p_ref, biasp_ref, wblk_ref,
                      linw_ref, linb_ref, out_ref, gin_ref):
    """Whole CNNtoRNN forward; all intermediate activations stay in VMEM.

    patches: (CIN*k*k, B*HW*HW) bf16    convw: (CCONV, CIN*k*k) bf16
    convb:   (CCONV, 1)  f32            fcw:   (CCONV, EMBED)   f32
    fcb:     (1, EMBED)  f32            emb:   (SEQ*B_PAD, EMBED) f32 t-major
    wih0p:   (EMBED, 8H) bf16   layer-0 input proj, packed gate cols
    biasp:   (1, 8H)     f32    b_ih+b_hh of both layers, packed gate cols
    wblk:    (2H, 8H)    bf16   block-diag wavefront weights
    linw:    (H, VOCAB_PAD) bf16        linb: (1, VOCAB_PAD) f32
    out:     (TP1*B_PAD, VOCAB_PAD) f32
    gin (scratch): ((TP1+1)*B_PAD, 8H) f32 — hoisted layer-0 input projection.
    """
    f32 = jnp.float32
    bf16 = jnp.bfloat16
    H = HIDDEN
    hw2 = HW * HW

    # ---- EncoderCNN stand-in ------------------------------------------------
    # Weight-stationary conv-as-matmul: (8, 36) @ (36, 512) -> lane-dense (8, 512).
    conv_t = jnp.dot(convw_ref[...], patches_ref[...],
                     preferred_element_type=f32) + convb_ref[...]
    conv_t = jnp.maximum(conv_t, 0.0)                      # (CCONV, B*HW*HW)

    # Global average pool: per-batch lane reduction.  The tiny fc (K=8) is a
    # broadcast-multiply + sublane reduce (VPU+XLU) — keeps everything
    # row-oriented, no transposes.  Dropout == identity (eval mode).
    inv = 1.0 / float(hw2)
    feat_rows = []
    for b in range(BATCH):
        pooled_b = jnp.sum(conv_t[:, b * hw2:(b + 1) * hw2],
                           axis=1, keepdims=True) * inv            # (CCONV, 1)
        fr = jnp.sum(pooled_b * fcw_ref[...], axis=0,
                     keepdims=True) + fcb_ref[...]                  # (1, EMBED)
        feat_rows.append(jnp.maximum(fr, 0.0))
    feat_pad = jnp.concatenate(
        feat_rows + [jnp.zeros((B_PAD - BATCH, EMBED), f32)], axis=0)  # (B_PAD, EMBED)

    # ---- DecoderRNN ---------------------------------------------------------
    # x_ext: t-major, TP1+1 blocks of B_PAD rows.  Block 0 = features row
    # (cat((features.unsqueeze(0), embeddings), dim=0)), blocks 1..SEQ =
    # caption embeddings, last block = zeros (feeds the discarded layer-0
    # "step TP1" of the final wavefront iteration).
    x_ext = jnp.concatenate(
        [feat_pad, emb_ref[...], jnp.zeros((B_PAD, EMBED), f32)], axis=0)

    # Hoisted layer-0 input projection + both layers' biases, written to a
    # VMEM scratch slab (bounds live ranges across the unrolled recurrence).
    # Packed gate-column layout: [i0 i1 | f0 f1 | g0 g1 | o0 o1], 32 lanes each.
    gin_ref[...] = jnp.dot(x_ext.astype(bf16), wih0p_ref[...],
                           preferred_element_type=f32) + biasp_ref[...]

    def lstm_step(h_pack, c_pack, gates):
        # gates: (B_PAD, 8H) pre-activation, packed; h/c_pack: (B_PAD, 2H)
        # with lanes 0:H = layer 0, H:2H = layer 1.  One sigmoid + one tanh
        # over the full 256 lanes covers both layers (merged EUP work).
        sg = jax.nn.sigmoid(gates)
        th = jnp.tanh(gates)
        i = sg[:, 0 * H:2 * H]
        f = sg[:, 2 * H:4 * H]
        g = th[:, 4 * H:6 * H]
        o = sg[:, 6 * H:8 * H]
        c_new = f * c_pack + i * g
        h_new = o * jnp.tanh(c_new)
        return h_new, c_new

    # Priming = layer-0 step 0 with zero initial state (no matmul needed).
    # Zeroing the g1 lanes keeps the layer-1 half of (h, c) exactly zero:
    # c1 = sigmoid(f1)*0 + sigmoid(i1)*tanh(0) = 0, h1 = sigmoid(o1)*tanh(0) = 0.
    lane = jax.lax.broadcasted_iota(jnp.int32, (B_PAD, H8), 1)
    keep = jnp.logical_or(lane < 5 * H, lane >= 6 * H)
    gates0 = jnp.where(keep, gin_ref[0:B_PAD, :], 0.0)
    zeros_pack = jnp.zeros((B_PAD, 2 * H), f32)
    h_pack, c_pack = lstm_step(zeros_pack, zeros_pack, gates0)

    # Wavefront recurrence, fully unrolled (static slices).  At step s,
    # h_pack = [h0_s | h1_{s-1}]; one (8,64)@(64,256) matmul produces layer-0
    # step s+1's recurrent gates (cols via w_hh_0) and layer-1 step s's fused
    # input+recurrent gates (cols via [w_ih_1; w_hh_1]).  The vocab projection
    # of h1_s is issued immediately and stored with a full-lane unmasked vst.
    for s in range(TP1):
        mm = jnp.dot(h_pack.astype(bf16), wblk_ref[...],
                     preferred_element_type=f32)                    # (B_PAD, 8H)
        gates = mm + gin_ref[(s + 1) * B_PAD:(s + 2) * B_PAD, :]
        h_pack, c_pack = lstm_step(h_pack, c_pack, gates)
        h1 = h_pack[:, H:2 * H]                                     # layer-1 h_t
        out_ref[s * B_PAD:(s + 1) * B_PAD, :] = (
            jnp.dot(h1.astype(bf16), linw_ref[...],
                    preferred_element_type=f32) + linb_ref[...])


_VMEM = pl.BlockSpec(memory_space=pltpu.MemorySpace.VMEM)


# -----------------------------------------------------------------------------
# Wrapper glue: im2col, embedding gather, weight packing, single pallas_call
# -----------------------------------------------------------------------------
def im2col_nchw_t(x, k, pad):
    """(B, C, H, W) -> (C*k*k, B*H*W) patches, 'same' padding (weight-stationary)."""
    B, C, H, W = x.shape
    xp = jnp.pad(x, ((0, 0), (0, 0), (pad, pad), (pad, pad)))
    taps = []
    for di in range(k):
        for dj in range(k):
            taps.append(xp[:, :, di:di + H, dj:dj + W])    # (B, C, H, W)
    p = jnp.stack(taps, axis=2)                            # (B, C, k*k, H, W)
    p = p.transpose(1, 2, 0, 3, 4)                         # (C, k*k, B, H, W)
    return p.reshape(C * k * k, B * H * W)


def _pack_gate_cols(w_l0, w_l1):
    """Interleave two (r, 4H) gate-major (i,f,g,o) blocks into (r, 8H)
    packed [i0 i1 f0 f1 g0 g1 o0 o1]."""
    H = HIDDEN
    cols = []
    for g in range(4):
        cols.append(w_l0[:, g * H:(g + 1) * H])
        cols.append(w_l1[:, g * H:(g + 1) * H])
    return jnp.concatenate(cols, axis=1)


def cnn_to_rnn_forward(images, captions, params):
    B = images.shape[0]
    f32 = jnp.float32
    bf16 = jnp.bfloat16

    # im2col in weight-stationary orientation; bf16 matmul operand.
    patches_t = im2col_nchw_t(images, KSIZE, KSIZE // 2).astype(bf16)

    # Embedding lookup (tiny gather) + batch padding; padded batch columns are
    # independent and get sliced off at the end.
    cap_pad = jnp.pad(captions, ((0, 0), (0, B_PAD - B)))  # (SEQ, B_PAD)
    emb = jnp.take(params["embed"], cap_pad, axis=0)       # (SEQ, B_PAD, EMBED)
    emb_flat = emb.reshape(SEQ * B_PAD, EMBED).astype(f32)

    # Packed decoder weights (gate-column interleave of the two layers).
    zg_e = jnp.zeros((EMBED, H4), f32)
    zg_h = jnp.zeros((HIDDEN, H4), f32)
    wih0p = _pack_gate_cols(params["w_ih_0"], zg_e).astype(bf16)     # (EMBED, 8H)
    biasp = _pack_gate_cols(params["b_0"], params["b_1"])            # (1, 8H)
    wblk = jnp.concatenate(
        [_pack_gate_cols(params["w_hh_0"], params["w_ih_1"]),        # h0 rows
         _pack_gate_cols(zg_h, params["w_hh_1"])],                   # h1 rows
        axis=0).astype(bf16)                                         # (2H, 8H)

    # Lane-pad the vocab projection so output stores are full 128 lanes.
    lin_w = jnp.pad(params["lin_w"],
                    ((0, 0), (0, VOCAB_PAD - VOCAB))).astype(bf16)
    lin_b = jnp.pad(params["lin_b"], ((0, 0), (0, VOCAB_PAD - VOCAB)))

    out = pl.pallas_call(
        cnn_to_rnn_kernel,
        out_shape=jax.ShapeDtypeStruct((TP1 * B_PAD, VOCAB_PAD), f32),
        in_specs=[_VMEM] * 11,
        out_specs=_VMEM,
        scratch_shapes=[pltpu.VMEM(((TP1 + 1) * B_PAD, H8), f32)],
    )(patches_t, params["conv_w"].astype(bf16), params["conv_b"],
      params["fc_w"], params["fc_b"], emb_flat,
      wih0p, biasp, wblk, lin_w, lin_b)

    # Drop batch / vocab padding: (T+1, B, VOCAB), PyTorch output layout.
    return out.reshape(TP1, B_PAD, VOCAB_PAD)[:, :B, :VOCAB]


# -----------------------------------------------------------------------------
# Deterministic parameter init
# -----------------------------------------------------------------------------
def init_params(key):
    keys = jax.random.split(key, 16)
    u = lambda k, shape, s=0.1: jax.random.uniform(k, shape, jnp.float32, -s, s)
    p = {
        # encoder stand-in: conv 3x3 (CIN -> CCONV) in weight-stationary form,
        # then fc (CCONV -> EMBED)
        "conv_w": u(keys[0], (CCONV, CIN * KSIZE * KSIZE)),
        "conv_b": u(keys[1], (CCONV, 1)),
        "fc_w":   u(keys[2], (CCONV, EMBED)),
        "fc_b":   u(keys[3], (1, EMBED)),
        # decoder
        "embed":  u(keys[4], (VOCAB, EMBED)),
        "lin_w":  u(keys[5], (HIDDEN, VOCAB)),
        "lin_b":  u(keys[6], (1, VOCAB)),
    }
    for layer in range(NUM_LAYERS):
        in_size = EMBED if layer == 0 else HIDDEN
        k0, k1, k2 = jax.random.split(keys[7 + layer], 3)
        # stored transposed relative to PyTorch: (in, 4H) and (H, 4H),
        # gate-major order i, f, g, o; bias = b_ih + b_hh folded.
        p[f"w_ih_{layer}"] = u(k0, (in_size, 4 * HIDDEN))
        p[f"w_hh_{layer}"] = u(k1, (HIDDEN, 4 * HIDDEN))
        p[f"b_{layer}"]    = u(k2, (1, 4 * HIDDEN))
    return p


# -----------------------------------------------------------------------------
# Main
# -----------------------------------------------------------------------------
if __name__ == "__main__":
    key = jax.random.PRNGKey(0)
    k_img, k_cap, k_par = jax.random.split(key, 3)

    images = jax.random.normal(k_img, (BATCH, CIN, HW, HW), jnp.float32)  # NCHW
    captions = jax.random.randint(k_cap, (SEQ, BATCH), 0, VOCAB, jnp.int32)
    params = init_params(k_par)

    fwd = jax.jit(functools.partial(cnn_to_rnn_forward, params=params))
    out = fwd(images, captions)
    jax.block_until_ready(out)

    assert out.shape == (SEQ + 1, BATCH, VOCAB), out.shape
    assert out.dtype == jnp.float32
    print("KERNEL_OK")
</pallas_src>

<mosaic_0001>
module attributes {stable_mosaic.version = 11 : i64} {
  func.func @cnn_to_rnn_kernel(%arg0: memref<36x512xbf16, #tpu.memory_space<vmem>>, %arg1: memref<8x36xbf16, #tpu.memory_space<vmem>>, %arg2: memref<8x1xf32, #tpu.memory_space<vmem>>, %arg3: memref<8x32xf32, #tpu.memory_space<vmem>>, %arg4: memref<1x32xf32, #tpu.memory_space<vmem>>, %arg5: memref<64x32xf32, #tpu.memory_space<vmem>>, %arg6: memref<32x256xbf16, #tpu.memory_space<vmem>>, %arg7: memref<1x256xf32, #tpu.memory_space<vmem>>, %arg8: memref<64x256xbf16, #tpu.memory_space<vmem>>, %arg9: memref<32x128xbf16, #tpu.memory_space<vmem>>, %arg10: memref<1x128xf32, #tpu.memory_space<vmem>>, %arg11: memref<72x128xf32, #tpu.memory_space<vmem>>, %arg12: memref<80x256xf32, #tpu.memory_space<vmem>>) attributes {dimension_semantics = [], scalar_prefetch = 0 : i64, scratch_operands = 1 : i64, tpu.core_type = #tpu.core_type<tc>} {
    %c0 = arith.constant 0 : index
    %c0_0 = arith.constant 0 : index
    %0 = vector.load %arg1[%c0, %c0_0] : memref<8x36xbf16, #tpu.memory_space<vmem>>, vector<8x36xbf16>
    %c0_1 = arith.constant 0 : index
    %c0_2 = arith.constant 0 : index
    %1 = vector.load %arg0[%c0_1, %c0_2] : memref<36x512xbf16, #tpu.memory_space<vmem>>, vector<36x512xbf16>
    %cst = arith.constant dense<0.000000e+00> : vector<8x512xf32>
    %2 = tpu.matmul %0, %1, %cst {dimension_numbers = #tpu.dot_dimension_numbers<[1], [0], [0], [1], [0, 0, 1, 1], [], []>} : vector<8x36xbf16>, vector<36x512xbf16>, vector<8x512xf32> -> vector<8x512xf32>
    %c0_3 = arith.constant 0 : index
    %c0_4 = arith.constant 0 : index
    %3 = vector.load %arg2[%c0_3, %c0_4] : memref<8x1xf32, #tpu.memory_space<vmem>>, vector<8x1xf32>
    %4 = vector.broadcast %3 : vector<8x1xf32> to vector<8x512xf32>
    %5 = arith.addf %2, %4 : vector<8x512xf32>
    %cst_5 = arith.constant 0.000000e+00 : f32
    %6 = vector.broadcast %cst_5 : f32 to vector<8x512xf32>
    %7 = arith.maximumf %5, %6 : vector<8x512xf32>
    %8 = vector.extract_strided_slice %7 {offsets = [0, 0], sizes = [8, 256], strides = [1, 1]} : vector<8x512xf32> to vector<8x256xf32>
    %cst_6 = arith.constant dense<0.000000e+00> : vector<8xf32>
    %9 = vector.multi_reduction <add>, %8, %cst_6 [1] : vector<8x256xf32> to vector<8xf32>
    %10 = vector.shape_cast %9 : vector<8xf32> to vector<8x1xf32>
    %cst_7 = arith.constant 3.906250e-03 : f32
    %11 = vector.broadcast %cst_7 : f32 to vector<8x1xf32>
    %12 = arith.mulf %10, %11 : vector<8x1xf32>
    %c0_8 = arith.constant 0 : index
    %c0_9 = arith.constant 0 : index
    %13 = vector.load %arg3[%c0_8, %c0_9] : memref<8x32xf32, #tpu.memory_space<vmem>>, vector<8x32xf32>
    %14 = vector.broadcast %12 : vector<8x1xf32> to vector<8x32xf32>
    %15 = arith.mulf %14, %13 : vector<8x32xf32>
    %cst_10 = arith.constant dense<0.000000e+00> : vector<32xf32>
    %16 = vector.multi_reduction <add>, %15, %cst_10 [0] : vector<8x32xf32> to vector<32xf32>
    %17 = vector.shape_cast %16 : vector<32xf32> to vector<1x32xf32>
    %c0_11 = arith.constant 0 : index
    %c0_12 = arith.constant 0 : index
    %18 = vector.load %arg4[%c0_11, %c0_12] : memref<1x32xf32, #tpu.memory_space<vmem>>, vector<1x32xf32>
    %19 = arith.addf %17, %18 : vector<1x32xf32>
    %cst_13 = arith.constant 0.000000e+00 : f32
    %20 = vector.broadcast %cst_13 : f32 to vector<1x32xf32>
    %21 = arith.maximumf %19, %20 : vector<1x32xf32>
    %22 = vector.extract_strided_slice %7 {offsets = [0, 256], sizes = [8, 256], strides = [1, 1]} : vector<8x512xf32> to vector<8x256xf32>
    %cst_14 = arith.constant dense<0.000000e+00> : vector<8xf32>
    %23 = vector.multi_reduction <add>, %22, %cst_14 [1] : vector<8x256xf32> to vector<8xf32>
    %24 = vector.shape_cast %23 : vector<8xf32> to vector<8x1xf32>
    %cst_15 = arith.constant 3.906250e-03 : f32
    %25 = vector.broadcast %cst_15 : f32 to vector<8x1xf32>
    %26 = arith.mulf %24, %25 : vector<8x1xf32>
    %c0_16 = arith.constant 0 : index
    %c0_17 = arith.constant 0 : index
    %27 = vector.load %arg3[%c0_16, %c0_17] : memref<8x32xf32, #tpu.memory_space<vmem>>, vector<8x32xf32>
    %28 = vector.broadcast %26 : vector<8x1xf32> to vector<8x32xf32>
    %29 = arith.mulf %28, %27 : vector<8x32xf32>
    %cst_18 = arith.constant dense<0.000000e+00> : vector<32xf32>
    %30 = vector.multi_reduction <add>, %29, %cst_18 [0] : vector<8x32xf32> to vector<32xf32>
    %31 = vector.shape_cast %30 : vector<32xf32> to vector<1x32xf32>
    %c0_19 = arith.constant 0 : index
    %c0_20 = arith.constant 0 : index
    %32 = vector.load %arg4[%c0_19, %c0_20] : memref<1x32xf32, #tpu.memory_space<vmem>>, vector<1x32xf32>
    %33 = arith.addf %31, %32 : vector<1x32xf32>
    %cst_21 = arith.constant 0.000000e+00 : f32
    %34 = vector.broadcast %cst_21 : f32 to vector<1x32xf32>
    %35 = arith.maximumf %33, %34 : vector<1x32xf32>
    %cst_22 = arith.constant 0.000000e+00 : f32
    %36 = vector.broadcast %cst_22 : f32 to vector<6x32xf32>
    %37 = tpu.concatenate %21, %35, %36 in 0 : vector<1x32xf32>, vector<1x32xf32>, vector<6x32xf32> -> vector<8x32xf32>
    %c0_23 = arith.constant 0 : index
    %c0_24 = arith.constant 0 : index
    %38 = vector.load %arg5[%c0_23, %c0_24] : memref<64x32xf32, #tpu.memory_space<vmem>>, vector<64x32xf32>
    %cst_25 = arith.constant 0.000000e+00 : f32
    %39 = vector.broadcast %cst_25 : f32 to vector<8x32xf32>
    %40 = tpu.concatenate %37, %38, %39 in 0 : vector<8x32xf32>, vector<64x32xf32>, vector<8x32xf32> -> vector<80x32xf32>
    %41 = arith.truncf %40 : vector<80x32xf32> to vector<80x32xbf16>
    %c0_26 = arith.constant 0 : index
    %c0_27 = arith.constant 0 : index
    %42 = vector.load %arg6[%c0_26, %c0_27] : memref<32x256xbf16, #tpu.memory_space<vmem>>, vector<32x256xbf16>
    %cst_28 = arith.constant dense<0.000000e+00> : vector<80x256xf32>
    %43 = tpu.matmul %41, %42, %cst_28 {dimension_numbers = #tpu.dot_dimension_numbers<[1], [0], [0], [1], [0, 0, 1, 1], [], []>} : vector<80x32xbf16>, vector<32x256xbf16>, vector<80x256xf32> -> vector<80x256xf32>
    %c0_29 = arith.constant 0 : index
    %c0_30 = arith.constant 0 : index
    %44 = vector.load %arg7[%c0_29, %c0_30] : memref<1x256xf32, #tpu.memory_space<vmem>>, vector<1x256xf32>
    %45 = vector.broadcast %44 : vector<1x256xf32> to vector<80x256xf32>
    %46 = arith.addf %43, %45 : vector<80x256xf32>
    %c0_31 = arith.constant 0 : index
    %c0_32 = arith.constant 0 : index
    %47 = vector.load %arg12[%c0_31, %c0_32] : memref<80x256xf32, #tpu.memory_space<vmem>>, vector<80x256xf32>
    tpu.vector_store %arg12[%c0_31, %c0_32], %46 {strides = array<i32>} : memref<80x256xf32, #tpu.memory_space<vmem>>, vector<80x256xf32>,
    %48 = tpu.iota {dimensions = array<i32: 1>} : vector<8x256xi32>
    %c160_i32 = arith.constant 160 : i32
    %49 = vector.broadcast %c160_i32 : i32 to vector<8x256xi32>
    %50 = arith.cmpi slt, %48, %49 : vector<8x256xi32>
    %c192_i32 = arith.constant 192 : i32
    %51 = vector.broadcast %c192_i32 : i32 to vector<8x256xi32>
    %52 = arith.cmpi sge, %48, %51 : vector<8x256xi32>
    %53 = arith.ori %50, %52 : vector<8x256xi1>
    %c0_33 = arith.constant 0 : index
    %c0_34 = arith.constant 0 : index
    %54 = vector.load %arg12[%c0_33, %c0_34] : memref<80x256xf32, #tpu.memory_space<vmem>>, vector<8x256xf32>
    %cst_35 = arith.constant 0.000000e+00 : f32
    %55 = vector.broadcast %cst_35 : f32 to vector<8x256xf32>
    %56 = arith.select %53, %54, %55 : vector<8x256xi1>, vector<8x256xf32>
    %cst_36 = arith.constant 0.000000e+00 : f32
    %57 = vector.broadcast %cst_36 : f32 to vector<8x64xf32>
    %58 = arith.negf %56 : vector<8x256xf32>
    %59 = math.exp %58 : vector<8x256xf32>
    %cst_37 = arith.constant 1.000000e+00 : f32
    %60 = vector.broadcast %cst_37 : f32 to vector<8x256xf32>
    %61 = arith.addf %60, %59 : vector<8x256xf32>
    %62 = arith.divf %60, %61 : vector<8x256xf32>
    %63 = math.tanh %56 : vector<8x256xf32>
    %64 = vector.extract_strided_slice %62 {offsets = [0, 0], sizes = [8, 64], strides = [1, 1]} : vector<8x256xf32> to vector<8x64xf32>
    %65 = vector.extract_strided_slice %62 {offsets = [0, 64], sizes = [8, 64], strides = [1, 1]} : vector<8x256xf32> to vector<8x64xf32>
    %66 = vector.extract_strided_slice %63 {offsets = [0, 128], sizes = [8, 64], strides = [1, 1]} : vector<8x256xf32> to vector<8x64xf32>
    %67 = vector.extract_strided_slice %62 {offsets = [0, 192], sizes = [8, 64], strides = [1, 1]} : vector<8x256xf32> to vector<8x64xf32>
    %68 = arith.mulf %65, %57 : vector<8x64xf32>
    %69 = arith.mulf %64, %66 : vector<8x64xf32>
    %70 = arith.addf %68, %69 : vector<8x64xf32>
    %71 = math.tanh %70 : vector<8x64xf32>
    %72 = arith.mulf %67, %71 : vector<8x64xf32>
    %73 = arith.truncf %72 : vector<8x64xf32> to vector<8x64xbf16>
    %c0_38 = arith.constant 0 : index
    %c0_39 = arith.constant 0 : index
    %74 = vector.load %arg8[%c0_38, %c0_39] : memref<64x256xbf16, #tpu.memory_space<vmem>>, vector<64x256xbf16>
    %cst_40 = arith.constant dense<0.000000e+00> : vector<8x256xf32>
    %75 = tpu.matmul %73, %74, %cst_40 {dimension_numbers = #tpu.dot_dimension_numbers<[1], [0], [0], [1], [0, 0, 1, 1], [], []>} : vector<8x64xbf16>, vector<64x256xbf16>, vector<8x256xf32> -> vector<8x256xf32>
    %c8 = arith.constant 8 : index
    %c0_41 = arith.constant 0 : index
    %76 = vector.load %arg12[%c8, %c0_41] : memref<80x256xf32, #tpu.memory_space<vmem>>, vector<8x256xf32>
    %77 = arith.addf %75, %76 : vector<8x256xf32>
    %78 = arith.negf %77 : vector<8x256xf32>
    %79 = math.exp %78 : vector<8x256xf32>
    %cst_42 = arith.constant 1.000000e+00 : f32
    %80 = vector.broadcast %cst_42 : f32 to vector<8x256xf32>
    %81 = arith.addf %80, %79 : vector<8x256xf32>
    %82 = arith.divf %80, %81 : vector<8x256xf32>
    %83 = math.tanh %77 : vector<8x256xf32>
    %84 = vector.extract_strided_slice %82 {offsets = [0, 0], sizes = [8, 64], strides = [1, 1]} : vector<8x256xf32> to vector<8x64xf32>
    %85 = vector.extract_strided_slice %82 {offsets = [0, 64], sizes = [8, 64], strides = [1, 1]} : vector<8x256xf32> to vector<8x64xf32>
    %86 = vector.extract_strided_slice %83 {offsets = [0, 128], sizes = [8, 64], strides = [1, 1]} : vector<8x256xf32> to vector<8x64xf32>
    %87 = vector.extract_strided_slice %82 {offsets = [0, 192], sizes = [8, 64], strides = [1, 1]} : vector<8x256xf32> to vector<8x64xf32>
    %88 = arith.mulf %85, %70 : vector<8x64xf32>
    %89 = arith.mulf %84, %86 : vector<8x64xf32>
    %90 = arith.addf %88, %89 : vector<8x64xf32>
    %91 = math.tanh %90 : vector<8x64xf32>
    %92 = arith.mulf %87, %91 : vector<8x64xf32>
    %93 = vector.extract_strided_slice %92 {offsets = [0, 32], sizes = [8, 32], strides = [1, 1]} : vector<8x64xf32> to vector<8x32xf32>
    %94 = arith.truncf %93 : vector<8x32xf32> to vector<8x32xbf16>
    %c0_43 = arith.constant 0 : index
    %c0_44 = arith.constant 0 : index
    %95 = vector.load %arg9[%c0_43, %c0_44] : memref<32x128xbf16, #tpu.memory_space<vmem>>, vector<32x128xbf16>
    %cst_45 = arith.constant dense<0.000000e+00> : vector<8x128xf32>
    %96 = tpu.matmul %94, %95, %cst_45 {dimension_numbers = #tpu.dot_dimension_numbers<[1], [0], [0], [1], [0, 0, 1, 1], [], []>} : vector<8x32xbf16>, vector<32x128xbf16>, vector<8x128xf32> -> vector<8x128xf32>
    %c0_46 = arith.constant 0 : index
    %c0_47 = arith.constant 0 : index
    %97 = vector.load %arg10[%c0_46, %c0_47] : memref<1x128xf32, #tpu.memory_space<vmem>>, vector<1x128xf32>
    %98 = vector.broadcast %97 : vector<1x128xf32> to vector<8x128xf32>
    %99 = arith.addf %96, %98 : vector<8x128xf32>
    %c0_48 = arith.constant 0 : index
    %c0_49 = arith.constant 0 : index
    %100 = vector.load %arg11[%c0_48, %c0_49] : memref<72x128xf32, #tpu.memory_space<vmem>>, vector<8x128xf32>
    tpu.vector_store %arg11[%c0_48, %c0_49], %99 {strides = array<i32>} : memref<72x128xf32, #tpu.memory_space<vmem>>, vector<8x128xf32>,
    %101 = arith.truncf %92 : vector<8x64xf32> to vector<8x64xbf16>
    %c0_50 = arith.constant 0 : index
    %c0_51 = arith.constant 0 : index
    %102 = vector.load %arg8[%c0_50, %c0_51] : memref<64x256xbf16, #tpu.memory_space<vmem>>, vector<64x256xbf16>
    %cst_52 = arith.constant dense<0.000000e+00> : vector<8x256xf32>
    %103 = tpu.matmul %101, %102, %cst_52 {dimension_numbers = #tpu.dot_dimension_numbers<[1], [0], [0], [1], [0, 0, 1, 1], [], []>} : vector<8x64xbf16>, vector<64x256xbf16>, vector<8x256xf32> -> vector<8x256xf32>
    %c16 = arith.constant 16 : index
    %c0_53 = arith.constant 0 : index
    %104 = vector.load %arg12[%c16, %c0_53] : memref<80x256xf32, #tpu.memory_space<vmem>>, vector<8x256xf32>
    %105 = arith.addf %103, %104 : vector<8x256xf32>
    %106 = arith.negf %105 : vector<8x256xf32>
    %107 = math.exp %106 : vector<8x256xf32>
    %cst_54 = arith.constant 1.000000e+00 : f32
    %108 = vector.broadcast %cst_54 : f32 to vector<8x256xf32>
    %109 = arith.addf %108, %107 : vector<8x256xf32>
    %110 = arith.divf %108, %109 : vector<8x256xf32>
    %111 = math.tanh %105 : vector<8x256xf32>
    %112 = vector.extract_strided_slice %110 {offsets = [0, 0], sizes = [8, 64], strides = [1, 1]} : vector<8x256xf32> to vector<8x64xf32>
    %113 = vector.extract_strided_slice %110 {offsets = [0, 64], sizes = [8, 64], strides = [1, 1]} : vector<8x256xf32> to vector<8x64xf32>
    %114 = vector.extract_strided_slice %111 {offsets = [0, 128], sizes = [8, 64], strides = [1, 1]} : vector<8x256xf32> to vector<8x64xf32>
    %115 = vector.extract_strided_slice %110 {offsets = [0, 192], sizes = [8, 64], strides = [1, 1]} : vector<8x256xf32> to vector<8x64xf32>
    %116 = arith.mulf %113, %90 : vector<8x64xf32>
    %117 = arith.mulf %112, %114 : vector<8x64xf32>
    %118 = arith.addf %116, %117 : vector<8x64xf32>
    %119 = math.tanh %118 : vector<8x64xf32>
    %120 = arith.mulf %115, %119 : vector<8x64xf32>
    %121 = vector.extract_strided_slice %120 {offsets = [0, 32], sizes = [8, 32], strides = [1, 1]} : vector<8x64xf32> to vector<8x32xf32>
    %122 = arith.truncf %121 : vector<8x32xf32> to vector<8x32xbf16>
    %c0_55 = arith.constant 0 : index
    %c0_56 = arith.constant 0 : index
    %123 = vector.load %arg9[%c0_55, %c0_56] : memref<32x128xbf16, #tpu.memory_space<vmem>>, vector<32x128xbf16>
    %cst_57 = arith.constant dense<0.000000e+00> : vector<8x128xf32>
    %124 = tpu.matmul %122, %123, %cst_57 {dimension_numbers = #tpu.dot_dimension_numbers<[1], [0], [0], [1], [0, 0, 1, 1], [], []>} : vector<8x32xbf16>, vector<32x128xbf16>, vector<8x128xf32> -> vector<8x128xf32>
    %c0_58 = arith.constant 0 : index
    %c0_59 = arith.constant 0 : index
    %125 = vector.load %arg10[%c0_58, %c0_59] : memref<1x128xf32, #tpu.memory_space<vmem>>, vector<1x128xf32>
    %126 = vector.broadcast %125 : vector<1x128xf32> to vector<8x128xf32>
    %127 = arith.addf %124, %126 : vector<8x128xf32>
    %c8_60 = arith.constant 8 : index
    %c0_61 = arith.constant 0 : index
    %128 = vector.load %arg11[%c8_60, %c0_61] : memref<72x128xf32, #tpu.memory_space<vmem>>, vector<8x128xf32>
    tpu.vector_store %arg11[%c8_60, %c0_61], %127 {strides = array<i32>} : memref<72x128xf32, #tpu.memory_space<vmem>>, vector<8x128xf32>,
    %129 = arith.truncf %120 : vector<8x64xf32> to vector<8x64xbf16>
    %c0_62 = arith.constant 0 : index
    %c0_63 = arith.constant 0 : index
    %130 = vector.load %arg8[%c0_62, %c0_63] : memref<64x256xbf16, #tpu.memory_space<vmem>>, vector<64x256xbf16>
    %cst_64 = arith.constant dense<0.000000e+00> : vector<8x256xf32>
    %131 = tpu.matmul %129, %130, %cst_64 {dimension_numbers = #tpu.dot_dimension_numbers<[1], [0], [0], [1], [0, 0, 1, 1], [], []>} : vector<8x64xbf16>, vector<64x256xbf16>, vector<8x256xf32> -> vector<8x256xf32>
    %c24 = arith.constant 24 : index
    %c0_65 = arith.constant 0 : index
    %132 = vector.load %arg12[%c24, %c0_65] : memref<80x256xf32, #tpu.memory_space<vmem>>, vector<8x256xf32>
    %133 = arith.addf %131, %132 : vector<8x256xf32>
    %134 = arith.negf %133 : vector<8x256xf32>
    %135 = math.exp %134 : vector<8x256xf32>
    %cst_66 = arith.constant 1.000000e+00 : f32
    %136 = vector.broadcast %cst_66 : f32 to vector<8x256xf32>
    %137 = arith.addf %136, %135 : vector<8x256xf32>
    %138 = arith.divf %136, %137 : vector<8x256xf32>
    %139 = math.tanh %133 : vector<8x256xf32>
    %140 = vector.extract_strided_slice %138 {offsets = [0, 0], sizes = [8, 64], strides = [1, 1]} : vector<8x256xf32> to vector<8x64xf32>
    %141 = vector.extract_strided_slice %138 {offsets = [0, 64], sizes = [8, 64], strides = [1, 1]} : vector<8x256xf32> to vector<8x64xf32>
    %142 = vector.extract_strided_slice %139 {offsets = [0, 128], sizes = [8, 64], strides = [1, 1]} : vector<8x256xf32> to vector<8x64xf32>
    %143 = vector.extract_strided_slice %138 {offsets = [0, 192], sizes = [8, 64], strides = [1, 1]} : vector<8x256xf32> to vector<8x64xf32>
    %144 = arith.mulf %141, %118 : vector<8x64xf32>
    %145 = arith.mulf %140, %142 : vector<8x64xf32>
    %146 = arith.addf %144, %145 : vector<8x64xf32>
    %147 = math.tanh %146 : vector<8x64xf32>
    %148 = arith.mulf %143, %147 : vector<8x64xf32>
    %149 = vector.extract_strided_slice %148 {offsets = [0, 32], sizes = [8, 32], strides = [1, 1]} : vector<8x64xf32> to vector<8x32xf32>
    %150 = arith.truncf %149 : vector<8x32xf32> to vector<8x32xbf16>
    %c0_67 = arith.constant 0 : index
    %c0_68 = arith.constant 0 : index
    %151 = vector.load %arg9[%c0_67, %c0_68] : memref<32x128xbf16, #tpu.memory_space<vmem>>, vector<32x128xbf16>
    %cst_69 = arith.constant dense<0.000000e+00> : vector<8x128xf32>
    %152 = tpu.matmul %150, %151, %cst_69 {dimension_numbers = #tpu.dot_dimension_numbers<[1], [0], [0], [1], [0, 0, 1, 1], [], []>} : vector<8x32xbf16>, vector<32x128xbf16>, vector<8x128xf32> -> vector<8x128xf32>
    %c0_70 = arith.constant 0 : index
    %c0_71 = arith.constant 0 : index
    %153 = vector.load %arg10[%c0_70, %c0_71] : memref<1x128xf32, #tpu.memory_space<vmem>>, vector<1x128xf32>
    %154 = vector.broadcast %153 : vector<1x128xf32> to vector<8x128xf32>
    %155 = arith.addf %152, %154 : vector<8x128xf32>
    %c16_72 = arith.constant 16 : index
    %c0_73 = arith.constant 0 : index
    %156 = vector.load %arg11[%c16_72, %c0_73] : memref<72x128xf32, #tpu.memory_space<vmem>>, vector<8x128xf32>
    tpu.vector_store %arg11[%c16_72, %c0_73], %155 {strides = array<i32>} : memref<72x128xf32, #tpu.memory_space<vmem>>, vector<8x128xf32>,
    %157 = arith.truncf %148 : vector<8x64xf32> to vector<8x64xbf16>
    %c0_74 = arith.constant 0 : index
    %c0_75 = arith.constant 0 : index
    %158 = vector.load %arg8[%c0_74, %c0_75] : memref<64x256xbf16, #tpu.memory_space<vmem>>, vector<64x256xbf16>
    %cst_76 = arith.constant dense<0.000000e+00> : vector<8x256xf32>
    %159 = tpu.matmul %157, %158, %cst_76 {dimension_numbers = #tpu.dot_dimension_numbers<[1], [0], [0], [1], [0, 0, 1, 1], [], []>} : vector<8x64xbf16>, vector<64x256xbf16>, vector<8x256xf32> -> vector<8x256xf32>
    %c32 = arith.constant 32 : index
    %c0_77 = arith.constant 0 : index
    %160 = vector.load %arg12[%c32, %c0_77] : memref<80x256xf32, #tpu.memory_space<vmem>>, vector<8x256xf32>
    %161 = arith.addf %159, %160 : vector<8x256xf32>
    %162 = arith.negf %161 : vector<8x256xf32>
    %163 = math.exp %162 : vector<8x256xf32>
    %cst_78 = arith.constant 1.000000e+00 : f32
    %164 = vector.broadcast %cst_78 : f32 to vector<8x256xf32>
    %165 = arith.addf %164, %163 : vector<8x256xf32>
    %166 = arith.divf %164, %165 : vector<8x256xf32>
    %167 = math.tanh %161 : vector<8x256xf32>
    %168 = vector.extract_strided_slice %166 {offsets = [0, 0], sizes = [8, 64], strides = [1, 1]} : vector<8x256xf32> to vector<8x64xf32>
    %169 = vector.extract_strided_slice %166 {offsets = [0, 64], sizes = [8, 64], strides = [1, 1]} : vector<8x256xf32> to vector<8x64xf32>
    %170 = vector.extract_strided_slice %167 {offsets = [0, 128], sizes = [8, 64], strides = [1, 1]} : vector<8x256xf32> to vector<8x64xf32>
    %171 = vector.extract_strided_slice %166 {offsets = [0, 192], sizes = [8, 64], strides = [1, 1]} : vector<8x256xf32> to vector<8x64xf32>
    %172 = arith.mulf %169, %146 : vector<8x64xf32>
    %173 = arith.mulf %168, %170 : vector<8x64xf32>
    %174 = arith.addf %172, %173 : vector<8x64xf32>
    %175 = math.tanh %174 : vector<8x64xf32>
    %176 = arith.mulf %171, %175 : vector<8x64xf32>
    %177 = vector.extract_strided_slice %176 {offsets = [0, 32], sizes = [8, 32], strides = [1, 1]} : vector<8x64xf32> to vector<8x32xf32>
    %178 = arith.truncf %177 : vector<8x32xf32> to vector<8x32xbf16>
    %c0_79 = arith.constant 0 : index
    %c0_80 = arith.constant 0 : index
    %179 = vector.load %arg9[%c0_79, %c0_80] : memref<32x128xbf16, #tpu.memory_space<vmem>>, vector<32x128xbf16>
    %cst_81 = arith.constant dense<0.000000e+00> : vector<8x128xf32>
    %180 = tpu.matmul %178, %179, %cst_81 {dimension_numbers = #tpu.dot_dimension_numbers<[1], [0], [0], [1], [0, 0, 1, 1], [], []>} : vector<8x32xbf16>, vector<32x128xbf16>, vector<8x128xf32> -> vector<8x128xf32>
    %c0_82 = arith.constant 0 : index
    %c0_83 = arith.constant 0 : index
    %181 = vector.load %arg10[%c0_82, %c0_83] : memref<1x128xf32, #tpu.memory_space<vmem>>, vector<1x128xf32>
    %182 = vector.broadcast %181 : vector<1x128xf32> to vector<8x128xf32>
    %183 = arith.addf %180, %182 : vector<8x128xf32>
    %c24_84 = arith.constant 24 : index
    %c0_85 = arith.constant 0 : index
    %184 = vector.load %arg11[%c24_84, %c0_85] : memref<72x128xf32, #tpu.memory_space<vmem>>, vector<8x128xf32>
    tpu.vector_store %arg11[%c24_84, %c0_85], %183 {strides = array<i32>} : memref<72x128xf32, #tpu.memory_space<vmem>>, vector<8x128xf32>,
    %185 = arith.truncf %176 : vector<8x64xf32> to vector<8x64xbf16>
    %c0_86 = arith.constant 0 : index
    %c0_87 = arith.constant 0 : index
    %186 = vector.load %arg8[%c0_86, %c0_87] : memref<64x256xbf16, #tpu.memory_space<vmem>>, vector<64x256xbf16>
    %cst_88 = arith.constant dense<0.000000e+00> : vector<8x256xf32>
    %187 = tpu.matmul %185, %186, %cst_88 {dimension_numbers = #tpu.dot_dimension_numbers<[1], [0], [0], [1], [0, 0, 1, 1], [], []>} : vector<8x64xbf16>, vector<64x256xbf16>, vector<8x256xf32> -> vector<8x256xf32>
    %c40 = arith.constant 40 : index
    %c0_89 = arith.constant 0 : index
    %188 = vector.load %arg12[%c40, %c0_89] : memref<80x256xf32, #tpu.memory_space<vmem>>, vector<8x256xf32>
    %189 = arith.addf %187, %188 : vector<8x256xf32>
    %190 = arith.negf %189 : vector<8x256xf32>
    %191 = math.exp %190 : vector<8x256xf32>
    %cst_90 = arith.constant 1.000000e+00 : f32
    %192 = vector.broadcast %cst_90 : f32 to vector<8x256xf32>
    %193 = arith.addf %192, %191 : vector<8x256xf32>
    %194 = arith.divf %192, %193 : vector<8x256xf32>
    %195 = math.tanh %189 : vector<8x256xf32>
    %196 = vector.extract_strided_slice %194 {offsets = [0, 0], sizes = [8, 64], strides = [1, 1]} : vector<8x256xf32> to vector<8x64xf32>
    %197 = vector.extract_strided_slice %194 {offsets = [0, 64], sizes = [8, 64], strides = [1, 1]} : vector<8x256xf32> to vector<8x64xf32>
    %198 = vector.extract_strided_slice %195 {offsets = [0, 128], sizes = [8, 64], strides = [1, 1]} : vector<8x256xf32> to vector<8x64xf32>
    %199 = vector.extract_strided_slice %194 {offsets = [0, 192], sizes = [8, 64], strides = [1, 1]} : vector<8x256xf32> to vector<8x64xf32>
    %200 = arith.mulf %197, %174 : vector<8x64xf32>
    %201 = arith.mulf %196, %198 : vector<8x64xf32>
    %202 = arith.addf %200, %201 : vector<8x64xf32>
    %203 = math.tanh %202 : vector<8x64xf32>
    %204 = arith.mulf %199, %203 : vector<8x64xf32>
    %205 = vector.extract_strided_slice %204 {offsets = [0, 32], sizes = [8, 32], strides = [1, 1]} : vector<8x64xf32> to vector<8x32xf32>
    %206 = arith.truncf %205 : vector<8x32xf32> to vector<8x32xbf16>
    %c0_91 = arith.constant 0 : index
    %c0_92 = arith.constant 0 : index
    %207 = vector.load %arg9[%c0_91, %c0_92] : memref<32x128xbf16, #tpu.memory_space<vmem>>, vector<32x128xbf16>
    %cst_93 = arith.constant dense<0.000000e+00> : vector<8x128xf32>
    %208 = tpu.matmul %206, %207, %cst_93 {dimension_numbers = #tpu.dot_dimension_numbers<[1], [0], [0], [1], [0, 0, 1, 1], [], []>} : vector<8x32xbf16>, vector<32x128xbf16>, vector<8x128xf32> -> vector<8x128xf32>
    %c0_94 = arith.constant 0 : index
    %c0_95 = arith.constant 0 : index
    %209 = vector.load %arg10[%c0_94, %c0_95] : memref<1x128xf32, #tpu.memory_space<vmem>>, vector<1x128xf32>
    %210 = vector.broadcast %209 : vector<1x128xf32> to vector<8x128xf32>
    %211 = arith.addf %208, %210 : vector<8x128xf32>
    %c32_96 = arith.constant 32 : index
    %c0_97 = arith.constant 0 : index
    %212 = vector.load %arg11[%c32_96, %c0_97] : memref<72x128xf32, #tpu.memory_space<vmem>>, vector<8x128xf32>
    tpu.vector_store %arg11[%c32_96, %c0_97], %211 {strides = array<i32>} : memref<72x128xf32, #tpu.memory_space<vmem>>, vector<8x128xf32>,
    %213 = arith.truncf %204 : vector<8x64xf32> to vector<8x64xbf16>
    %c0_98 = arith.constant 0 : index
    %c0_99 = arith.constant 0 : index
    %214 = vector.load %arg8[%c0_98, %c0_99] : memref<64x256xbf16, #tpu.memory_space<vmem>>, vector<64x256xbf16>
    %cst_100 = arith.constant dense<0.000000e+00> : vector<8x256xf32>
    %215 = tpu.matmul %213, %214, %cst_100 {dimension_numbers = #tpu.dot_dimension_numbers<[1], [0], [0], [1], [0, 0, 1, 1], [], []>} : vector<8x64xbf16>, vector<64x256xbf16>, vector<8x256xf32> -> vector<8x256xf32>
    %c48 = arith.constant 48 : index
    %c0_101 = arith.constant 0 : index
    %216 = vector.load %arg12[%c48, %c0_101] : memref<80x256xf32, #tpu.memory_space<vmem>>, vector<8x256xf32>
    %217 = arith.addf %215, %216 : vector<8x256xf32>
    %218 = arith.negf %217 : vector<8x256xf32>
    %219 = math.exp %218 : vector<8x256xf32>
    %cst_102 = arith.constant 1.000000e+00 : f32
    %220 = vector.broadcast %cst_102 : f32 to vector<8x256xf32>
    %221 = arith.addf %220, %219 : vector<8x256xf32>
    %222 = arith.divf %220, %221 : vector<8x256xf32>
    %223 = math.tanh %217 : vector<8x256xf32>
    %224 = vector.extract_strided_slice %222 {offsets = [0, 0], sizes = [8, 64], strides = [1, 1]} : vector<8x256xf32> to vector<8x64xf32>
    %225 = vector.extract_strided_slice %222 {offsets = [0, 64], sizes = [8, 64], strides = [1, 1]} : vector<8x256xf32> to vector<8x64xf32>
    %226 = vector.extract_strided_slice %223 {offsets = [0, 128], sizes = [8, 64], strides = [1, 1]} : vector<8x256xf32> to vector<8x64xf32>
    %227 = vector.extract_strided_slice %222 {offsets = [0, 192], sizes = [8, 64], strides = [1, 1]} : vector<8x256xf32> to vector<8x64xf32>
    %228 = arith.mulf %225, %202 : vector<8x64xf32>
    %229 = arith.mulf %224, %226 : vector<8x64xf32>
    %230 = arith.addf %228, %229 : vector<8x64xf32>
    %231 = math.tanh %230 : vector<8x64xf32>
    %232 = arith.mulf %227, %231 : vector<8x64xf32>
    %233 = vector.extract_strided_slice %232 {offsets = [0, 32], sizes = [8, 32], strides = [1, 1]} : vector<8x64xf32> to vector<8x32xf32>
    %234 = arith.truncf %233 : vector<8x32xf32> to vector<8x32xbf16>
    %c0_103 = arith.constant 0 : index
    %c0_104 = arith.constant 0 : index
    %235 = vector.load %arg9[%c0_103, %c0_104] : memref<32x128xbf16, #tpu.memory_space<vmem>>, vector<32x128xbf16>
    %cst_105 = arith.constant dense<0.000000e+00> : vector<8x128xf32>
    %236 = tpu.matmul %234, %235, %cst_105 {dimension_numbers = #tpu.dot_dimension_numbers<[1], [0], [0], [1], [0, 0, 1, 1], [], []>} : vector<8x32xbf16>, vector<32x128xbf16>, vector<8x128xf32> -> vector<8x128xf32>
    %c0_106 = arith.constant 0 : index
    %c0_107 = arith.constant 0 : index
    %237 = vector.load %arg10[%c0_106, %c0_107] : memref<1x128xf32, #tpu.memory_space<vmem>>, vector<1x128xf32>
    %238 = vector.broadcast %237 : vector<1x128xf32> to vector<8x128xf32>
    %239 = arith.addf %236, %238 : vector<8x128xf32>
    %c40_108 = arith.constant 40 : index
    %c0_109 = arith.constant 0 : index
    %240 = vector.load %arg11[%c40_108, %c0_109] : memref<72x128xf32, #tpu.memory_space<vmem>>, vector<8x128xf32>
    tpu.vector_store %arg11[%c40_108, %c0_109], %239 {strides = array<i32>} : memref<72x128xf32, #tpu.memory_space<vmem>>, vector<8x128xf32>,
    %241 = arith.truncf %232 : vector<8x64xf32> to vector<8x64xbf16>
    %c0_110 = arith.constant 0 : index
    %c0_111 = arith.constant 0 : index
    %242 = vector.load %arg8[%c0_110, %c0_111] : memref<64x256xbf16, #tpu.memory_space<vmem>>, vector<64x256xbf16>
    %cst_112 = arith.constant dense<0.000000e+00> : vector<8x256xf32>
    %243 = tpu.matmul %241, %242, %cst_112 {dimension_numbers = #tpu.dot_dimension_numbers<[1], [0], [0], [1], [0, 0, 1, 1], [], []>} : vector<8x64xbf16>, vector<64x256xbf16>, vector<8x256xf32> -> vector<8x256xf32>
    %c56 = arith.constant 56 : index
    %c0_113 = arith.constant 0 : index
    %244 = vector.load %arg12[%c56, %c0_113] : memref<80x256xf32, #tpu.memory_space<vmem>>, vector<8x256xf32>
    %245 = arith.addf %243, %244 : vector<8x256xf32>
    %246 = arith.negf %245 : vector<8x256xf32>
    %247 = math.exp %246 : vector<8x256xf32>
    %cst_114 = arith.constant 1.000000e+00 : f32
    %248 = vector.broadcast %cst_114 : f32 to vector<8x256xf32>
    %249 = arith.addf %248, %247 : vector<8x256xf32>
    %250 = arith.divf %248, %249 : vector<8x256xf32>
    %251 = math.tanh %245 : vector<8x256xf32>
    %252 = vector.extract_strided_slice %250 {offsets = [0, 0], sizes = [8, 64], strides = [1, 1]} : vector<8x256xf32> to vector<8x64xf32>
    %253 = vector.extract_strided_slice %250 {offsets = [0, 64], sizes = [8, 64], strides = [1, 1]} : vector<8x256xf32> to vector<8x64xf32>
    %254 = vector.extract_strided_slice %251 {offsets = [0, 128], sizes = [8, 64], strides = [1, 1]} : vector<8x256xf32> to vector<8x64xf32>
    %255 = vector.extract_strided_slice %250 {offsets = [0, 192], sizes = [8, 64], strides = [1, 1]} : vector<8x256xf32> to vector<8x64xf32>
    %256 = arith.mulf %253, %230 : vector<8x64xf32>
    %257 = arith.mulf %252, %254 : vector<8x64xf32>
    %258 = arith.addf %256, %257 : vector<8x64xf32>
    %259 = math.tanh %258 : vector<8x64xf32>
    %260 = arith.mulf %255, %259 : vector<8x64xf32>
    %261 = vector.extract_strided_slice %260 {offsets = [0, 32], sizes = [8, 32], strides = [1, 1]} : vector<8x64xf32> to vector<8x32xf32>
    %262 = arith.truncf %261 : vector<8x32xf32> to vector<8x32xbf16>
    %c0_115 = arith.constant 0 : index
    %c0_116 = arith.constant 0 : index
    %263 = vector.load %arg9[%c0_115, %c0_116] : memref<32x128xbf16, #tpu.memory_space<vmem>>, vector<32x128xbf16>
    %cst_117 = arith.constant dense<0.000000e+00> : vector<8x128xf32>
    %264 = tpu.matmul %262, %263, %cst_117 {dimension_numbers = #tpu.dot_dimension_numbers<[1], [0], [0], [1], [0, 0, 1, 1], [], []>} : vector<8x32xbf16>, vector<32x128xbf16>, vector<8x128xf32> -> vector<8x128xf32>
    %c0_118 = arith.constant 0 : index
    %c0_119 = arith.constant 0 : index
    %265 = vector.load %arg10[%c0_118, %c0_119] : memref<1x128xf32, #tpu.memory_space<vmem>>, vector<1x128xf32>
    %266 = vector.broadcast %265 : vector<1x128xf32> to vector<8x128xf32>
    %267 = arith.addf %264, %266 : vector<8x128xf32>
    %c48_120 = arith.constant 48 : index
    %c0_121 = arith.constant 0 : index
    %268 = vector.load %arg11[%c48_120, %c0_121] : memref<72x128xf32, #tpu.memory_space<vmem>>, vector<8x128xf32>
    tpu.vector_store %arg11[%c48_120, %c0_121], %267 {strides = array<i32>} : memref<72x128xf32, #tpu.memory_space<vmem>>, vector<8x128xf32>,
    %269 = arith.truncf %260 : vector<8x64xf32> to vector<8x64xbf16>
    %c0_122 = arith.constant 0 : index
    %c0_123 = arith.constant 0 : index
    %270 = vector.load %arg8[%c0_122, %c0_123] : memref<64x256xbf16, #tpu.memory_space<vmem>>, vector<64x256xbf16>
    %cst_124 = arith.constant dense<0.000000e+00> : vector<8x256xf32>
    %271 = tpu.matmul %269, %270, %cst_124 {dimension_numbers = #tpu.dot_dimension_numbers<[1], [0], [0], [1], [0, 0, 1, 1], [], []>} : vector<8x64xbf16>, vector<64x256xbf16>, vector<8x256xf32> -> vector<8x256xf32>
    %c64 = arith.constant 64 : index
    %c0_125 = arith.constant 0 : index
    %272 = vector.load %arg12[%c64, %c0_125] : memref<80x256xf32, #tpu.memory_space<vmem>>, vector<8x256xf32>
    %273 = arith.addf %271, %272 : vector<8x256xf32>
    %274 = arith.negf %273 : vector<8x256xf32>
    %275 = math.exp %274 : vector<8x256xf32>
    %cst_126 = arith.constant 1.000000e+00 : f32
    %276 = vector.broadcast %cst_126 : f32 to vector<8x256xf32>
    %277 = arith.addf %276, %275 : vector<8x256xf32>
    %278 = arith.divf %276, %277 : vector<8x256xf32>
    %279 = math.tanh %273 : vector<8x256xf32>
    %280 = vector.extract_strided_slice %278 {offsets = [0, 0], sizes = [8, 64], strides = [1, 1]} : vector<8x256xf32> to vector<8x64xf32>
    %281 = vector.extract_strided_slice %278 {offsets = [0, 64], sizes = [8, 64], strides = [1, 1]} : vector<8x256xf32> to vector<8x64xf32>
    %282 = vector.extract_strided_slice %279 {offsets = [0, 128], sizes = [8, 64], strides = [1, 1]} : vector<8x256xf32> to vector<8x64xf32>
    %283 = vector.extract_strided_slice %278 {offsets = [0, 192], sizes = [8, 64], strides = [1, 1]} : vector<8x256xf32> to vector<8x64xf32>
    %284 = arith.mulf %281, %258 : vector<8x64xf32>
    %285 = arith.mulf %280, %282 : vector<8x64xf32>
    %286 = arith.addf %284, %285 : vector<8x64xf32>
    %287 = math.tanh %286 : vector<8x64xf32>
    %288 = arith.mulf %283, %287 : vector<8x64xf32>
    %289 = vector.extract_strided_slice %288 {offsets = [0, 32], sizes = [8, 32], strides = [1, 1]} : vector<8x64xf32> to vector<8x32xf32>
    %290 = arith.truncf %289 : vector<8x32xf32> to vector<8x32xbf16>
    %c0_127 = arith.constant 0 : index
    %c0_128 = arith.constant 0 : index
    %291 = vector.load %arg9[%c0_127, %c0_128] : memref<32x128xbf16, #tpu.memory_space<vmem>>, vector<32x128xbf16>
    %cst_129 = arith.constant dense<0.000000e+00> : vector<8x128xf32>
    %292 = tpu.matmul %290, %291, %cst_129 {dimension_numbers = #tpu.dot_dimension_numbers<[1], [0], [0], [1], [0, 0, 1, 1], [], []>} : vector<8x32xbf16>, vector<32x128xbf16>, vector<8x128xf32> -> vector<8x128xf32>
    %c0_130 = arith.constant 0 : index
    %c0_131 = arith.constant 0 : index
    %293 = vector.load %arg10[%c0_130, %c0_131] : memref<1x128xf32, #tpu.memory_space<vmem>>, vector<1x128xf32>
    %294 = vector.broadcast %293 : vector<1x128xf32> to vector<8x128xf32>
    %295 = arith.addf %292, %294 : vector<8x128xf32>
    %c56_132 = arith.constant 56 : index
    %c0_133 = arith.constant 0 : index
    %296 = vector.load %arg11[%c56_132, %c0_133] : memref<72x128xf32, #tpu.memory_space<vmem>>, vector<8x128xf32>
    tpu.vector_store %arg11[%c56_132, %c0_133], %295 {strides = array<i32>} : memref<72x128xf32, #tpu.memory_space<vmem>>, vector<8x128xf32>,
    %297 = arith.truncf %288 : vector<8x64xf32> to vector<8x64xbf16>
    %c0_134 = arith.constant 0 : index
    %c0_135 = arith.constant 0 : index
    %298 = vector.load %arg8[%c0_134, %c0_135] : memref<64x256xbf16, #tpu.memory_space<vmem>>, vector<64x256xbf16>
    %cst_136 = arith.constant dense<0.000000e+00> : vector<8x256xf32>
    %299 = tpu.matmul %297, %298, %cst_136 {dimension_numbers = #tpu.dot_dimension_numbers<[1], [0], [0], [1], [0, 0, 1, 1], [], []>} : vector<8x64xbf16>, vector<64x256xbf16>, vector<8x256xf32> -> vector<8x256xf32>
    %c72 = arith.constant 72 : index
    %c0_137 = arith.constant 0 : index
    %300 = vector.load %arg12[%c72, %c0_137] : memref<80x256xf32, #tpu.memory_space<vmem>>, vector<8x256xf32>
    %301 = arith.addf %299, %300 : vector<8x256xf32>
    %302 = arith.negf %301 : vector<8x256xf32>
    %303 = math.exp %302 : vector<8x256xf32>
    %cst_138 = arith.constant 1.000000e+00 : f32
    %304 = vector.broadcast %cst_138 : f32 to vector<8x256xf32>
    %305 = arith.addf %304, %303 : vector<8x256xf32>
    %306 = arith.divf %304, %305 : vector<8x256xf32>
    %307 = math.tanh %301 : vector<8x256xf32>
    %308 = vector.extract_strided_slice %306 {offsets = [0, 0], sizes = [8, 64], strides = [1, 1]} : vector<8x256xf32> to vector<8x64xf32>
    %309 = vector.extract_strided_slice %306 {offsets = [0, 64], sizes = [8, 64], strides = [1, 1]} : vector<8x256xf32> to vector<8x64xf32>
    %310 = vector.extract_strided_slice %307 {offsets = [0, 128], sizes = [8, 64], strides = [1, 1]} : vector<8x256xf32> to vector<8x64xf32>
    %311 = vector.extract_strided_slice %306 {offsets = [0, 192], sizes = [8, 64], strides = [1, 1]} : vector<8x256xf32> to vector<8x64xf32>
    %312 = arith.mulf %309, %286 : vector<8x64xf32>
    %313 = arith.mulf %308, %310 : vector<8x64xf32>
    %314 = arith.addf %312, %313 : vector<8x64xf32>
    %315 = math.tanh %314 : vector<8x64xf32>
    %316 = arith.mulf %311, %315 : vector<8x64xf32>
    %317 = vector.extract_strided_slice %316 {offsets = [0, 32], sizes = [8, 32], strides = [1, 1]} : vector<8x64xf32> to vector<8x32xf32>
    %318 = arith.truncf %317 : vector<8x32xf32> to vector<8x32xbf16>
    %c0_139 = arith.constant 0 : index
    %c0_140 = arith.constant 0 : index
    %319 = vector.load %arg9[%c0_139, %c0_140] : memref<32x128xbf16, #tpu.memory_space<vmem>>, vector<32x128xbf16>
    %cst_141 = arith.constant dense<0.000000e+00> : vector<8x128xf32>
    %320 = tpu.matmul %318, %319, %cst_141 {dimension_numbers = #tpu.dot_dimension_numbers<[1], [0], [0], [1], [0, 0, 1, 1], [], []>} : vector<8x32xbf16>, vector<32x128xbf16>, vector<8x128xf32> -> vector<8x128xf32>
    %c0_142 = arith.constant 0 : index
    %c0_143 = arith.constant 0 : index
    %321 = vector.load %arg10[%c0_142, %c0_143] : memref<1x128xf32, #tpu.memory_space<vmem>>, vector<1x128xf32>
    %322 = vector.broadcast %321 : vector<1x128xf32> to vector<8x128xf32>
    %323 = arith.addf %320, %322 : vector<8x128xf32>
    %c64_144 = arith.constant 64 : index
    %c0_145 = arith.constant 0 : index
    %324 = vector.load %arg11[%c64_144, %c0_145] : memref<72x128xf32, #tpu.memory_space<vmem>>, vector<8x128xf32>
    tpu.vector_store %arg11[%c64_144, %c0_145], %323 {strides = array<i32>} : memref<72x128xf32, #tpu.memory_space<vmem>>, vector<8x128xf32>,
    return
  }
}

</mosaic_0001>

<llo_original>
// kernel: cnn_to_rnn_forward.1
$region0: #{cnn_to_rnn_forward.1}
  #allocation0 [shape = 'u32[]', space=smem, size = 0x4, offset = 0x4, fixed_abs, tag = 'smem constant byte address 0x4 - core index']
  #allocation1 [shape = 'u32[144,128]{1,0:T(1,128)}', space=vmem, size = 0x12000, scoped, tag = 'internal scratch']
  #allocation2 [shape = 'f32[80,256]{1,0:T(8,128)}', space=vmem, size = 0x14000, scoped, tag = 'scratch operand']
  %s0 = inlined_call_operand.vmem [shape: bf16[36,512], index: 0, kind: input, shape index: {}]
  %s1 = inlined_call_operand.vmem [shape: bf16[8,36], index: 1, kind: input, shape index: {}]
  %s2 = inlined_call_operand.vmem [shape: f32[8,1], index: 2, kind: input, shape index: {}]
  %s3 = inlined_call_operand.vmem [shape: f32[8,32], index: 3, kind: input, shape index: {}]
  %s4 = inlined_call_operand.vmem [shape: f32[1,32], index: 4, kind: input, shape index: {}]
  %s5 = inlined_call_operand.vmem [shape: f32[64,32], index: 5, kind: input, shape index: {}]
  %s6 = inlined_call_operand.vmem [shape: bf16[32,256], index: 6, kind: input, shape index: {}]
  %s7 = inlined_call_operand.vmem [shape: f32[1,256], index: 7, kind: input, shape index: {}]
  %s8 = inlined_call_operand.vmem [shape: bf16[64,256], index: 8, kind: input, shape index: {}]
  %s9 = inlined_call_operand.vmem [shape: bf16[32,128], index: 9, kind: input, shape index: {}]
  %s10 = inlined_call_operand.vmem [shape: f32[1,128], index: 10, kind: input, shape index: {}]
  %s11 = inlined_call_operand.vmem [shape: f32[72,128], index: 11, kind: output, shape index: {}]
  %s12 = sld [smem:[#allocation0]]
  $region54: #{cnn_to_rnn_forward.1} parent=0
    _
  %s14 = ssub.s32 1, %s12
  %s15 = scalar_select 0, %s14, %s12
  // Predicated region
  $region2: #{cnn_to_rnn_forward.1} parent=0 // pred_check
    _
  $region3: #{cnn_to_rnn_forward.1} parent=0 // pred_check_branch
    %17 = sbr.rel (0) target = $region5
  $region4: #{cnn_to_rnn_forward.1} parent=0 // pred_region
    _
  $region5: #{cnn_to_rnn_forward.1} parent=0 // pred_fallthru
    _
  // Predicated region
  $region6: #{cnn_to_rnn_forward.1} parent=0 // pred_check
    _
  $region7: #{cnn_to_rnn_forward.1} parent=0 // pred_check_branch
    %19 = sbr.rel (0) target = $region9
  $region8: #{cnn_to_rnn_forward.1} parent=0 // pred_region
    _
  $region9: #{cnn_to_rnn_forward.1} parent=0 // pred_fallthru
    _
  // Predicated region
  $region10: #{cnn_to_rnn_forward.1} parent=0 // pred_check
    _
  $region11: #{cnn_to_rnn_forward.1} parent=0 // pred_check_branch
    %21 = sbr.rel (0) target = $region13
  $region12: #{cnn_to_rnn_forward.1} parent=0 // pred_region
    _
  $region13: #{cnn_to_rnn_forward.1} parent=0 // pred_fallthru
    _
  // Predicated region
  $region14: #{cnn_to_rnn_forward.1} parent=0 // pred_check
    _
  $region15: #{cnn_to_rnn_forward.1} parent=0 // pred_check_branch
    %23 = sbr.rel (0) target = $region17
  $region16: #{cnn_to_rnn_forward.1} parent=0 // pred_region
    _
  $region17: #{cnn_to_rnn_forward.1} parent=0 // pred_fallthru
    _
  // Predicated region
  $region18: #{cnn_to_rnn_forward.1} parent=0 // pred_check
    _
  $region19: #{cnn_to_rnn_forward.1} parent=0 // pred_check_branch
    %25 = sbr.rel (0) target = $region21
  $region20: #{cnn_to_rnn_forward.1} parent=0 // pred_region
    _
  $region21: #{cnn_to_rnn_forward.1} parent=0 // pred_fallthru
    _
  // Predicated region
  $region22: #{cnn_to_rnn_forward.1} parent=0 // pred_check
    _
  $region23: #{cnn_to_rnn_forward.1} parent=0 // pred_check_branch
    %27 = sbr.rel (0) target = $region25
  $region24: #{cnn_to_rnn_forward.1} parent=0 // pred_region
    _
  $region25: #{cnn_to_rnn_forward.1} parent=0 // pred_fallthru
    _
  // Predicated region
  $region26: #{cnn_to_rnn_forward.1} parent=0 // pred_check
    _
  $region27: #{cnn_to_rnn_forward.1} parent=0 // pred_check_branch
    %29 = sbr.rel (0) target = $region29
  $region28: #{cnn_to_rnn_forward.1} parent=0 // pred_region
    _
  $region29: #{cnn_to_rnn_forward.1} parent=0 // pred_fallthru
    _
  // Predicated region
  $region30: #{cnn_to_rnn_forward.1} parent=0 // pred_check
    _
  $region31: #{cnn_to_rnn_forward.1} parent=0 // pred_check_branch
    %31 = sbr.rel (0) target = $region33
  $region32: #{cnn_to_rnn_forward.1} parent=0 // pred_region
    _
  $region33: #{cnn_to_rnn_forward.1} parent=0 // pred_fallthru
    _
  // Predicated region
  $region34: #{cnn_to_rnn_forward.1} parent=0 // pred_check
    _
  $region35: #{cnn_to_rnn_forward.1} parent=0 // pred_check_branch
    %33 = sbr.rel (0) target = $region37
  $region36: #{cnn_to_rnn_forward.1} parent=0 // pred_region
    _
  $region37: #{cnn_to_rnn_forward.1} parent=0 // pred_fallthru
    _
  // Predicated region
  $region38: #{cnn_to_rnn_forward.1} parent=0 // pred_check
    _
  $region39: #{cnn_to_rnn_forward.1} parent=0 // pred_check_branch
    %35 = sbr.rel (0) target = $region41
  $region40: #{cnn_to_rnn_forward.1} parent=0 // pred_region
    _
  $region41: #{cnn_to_rnn_forward.1} parent=0 // pred_fallthru
    _
  // Predicated region
  $region42: #{cnn_to_rnn_forward.1} parent=0 // pred_check
    _
  $region43: #{cnn_to_rnn_forward.1} parent=0 // pred_check_branch
    %37 = sbr.rel (0) target = $region45
  $region44: #{cnn_to_rnn_forward.1} parent=0 // pred_region
    _
  $region45: #{cnn_to_rnn_forward.1} parent=0 // pred_fallthru
    _
  %v39 = vld [vmem:[%s1] sm:$0xf]
  %v40 = vld [vmem:[%s0] sm:$0xff]
  %v41 = vld [vmem:[%s0 + $0x8] sm:$0xff]
  %v42 = vld [vmem:[%s0 + $0x10] sm:$0xff]
  %v43 = vld [vmem:[%s0 + $0x18] sm:$0xff]
  %v44 = vld [vmem:[%s0 + $0x20] sm:$0xff]
  %v45 = vld [vmem:[%s0 + $0x28] sm:$0xff]
  %v46 = vld [vmem:[%s0 + $0x30] sm:$0xff]
  %v47 = vld [vmem:[%s0 + $0x38] sm:$0xff]
  %v48 = vld [vmem:[%s0 + $0x40] sm:$0x33]
  %v49 = vld [vmem:[%s0 + $0x48] sm:$0x33]
  %v50 = vld [vmem:[%s2] sm:$0xff]
  %52 = vset.pattern.permute.xlu0 0
  %53 = vperm.xlu0 %52, %v50
  %v54 = vpop.permute.xlu0 %53
  %v66 = vunpack.c.l.b16 %v40
  %v67 = vunpack.c.h.b16 %v40
  %v68 = vunpack.c.l.b16 %v41
  %v69 = vunpack.c.h.b16 %v41
  %v70 = vunpack.c.l.b16 %v42
  %v71 = vunpack.c.h.b16 %v42
  %v72 = vunpack.c.l.b16 %v43
  %v73 = vunpack.c.h.b16 %v43
  %v74 = vunpack.c.l.b16 %v44
  %v75 = vunpack.c.h.b16 %v44
  %v76 = vunpack.c.l.b16 %v45
  %v77 = vunpack.c.h.b16 %v45
  %v78 = vunpack.c.l.b16 %v46
  %v79 = vunpack.c.h.b16 %v46
  %v80 = vunpack.c.l.b16 %v47
  %v81 = vunpack.c.h.b16 %v47
  %v82 = vunpack.c.l.b16 %v48
  %v83 = vunpack.c.h.b16 %v48
  %v84 = vunpack.c.l.b16 %v49
  %v85 = vunpack.c.h.b16 %v49
  %v86 = vpack.c.b16 %v70, %v66
  %v87 = vpack.c.b16 %v71, %v67
  %v88 = vpack.c.b16 %v72, %v68
  %v89 = vpack.c.b16 %v73, %v69
  %v90 = vpack.c.b16 %v78, %v74
  %v91 = vpack.c.b16 %v79, %v75
  %v92 = vpack.c.b16 %v80, %v76
  %v93 = vpack.c.b16 %v81, %v77
  %v94 = vpack.c.b16 %v82, %v82
  %v95 = vpack.c.b16 %v83, %v83
  %v96 = vpack.c.b16 %v84, %v84
  %v97 = vpack.c.b16 %v85, %v85
  %vm106 = vcmask 293888
  %v108 = vsel %vm106, %v39, 0
  %vm110 = vcmask 1041408
  %v112 = vsel %vm110, %v94, 0
  %v115 = vsel %vm110, %v95, 0
  %v118 = vsel %vm110, %v96, 0
  %v121 = vsel %vm110, %v97, 0
  %123 = vmatprep.subr.bf16.mxu0 %v87
  %124 = vmatpush1.bf16.msra.mxu0 %v86
  %125 = vmatprep.subr.bf16.mxu0 %v91
  %126 = vmatpush1.bf16.msra.mxu0 %v90
  %127 = vmatprep.subr.bf16.mxu0 %v115
  %128 = vmatpush1.bf16.msra.mxu0 %v112
  %129 = vmatprep.subr.bf16.mxu0 0
  %130 = vmatpush1.bf16.msra.mxu0 0
  %131 = vmatprep.subr.bf16.mxu0 0
  %132 = vmatpush1.bf16.msra.mxu0 0
  %133 = vmatprep.subr.bf16.mxu0 0
  %134 = vmatpush1.bf16.msra.mxu0 0
  %135 = vmatprep.subr.bf16.mxu0 0
  %136 = vmatpush1.bf16.msra.mxu0 0
  %137 = vmatprep.subr.bf16.mxu0 0
  %138 = vmatpush1.bf16.msra.mxu0 0
  %139 = vmatprep.subr.bf16.mxu0 0
  %140 = vmatpush1.bf16.msra.mxu0 0
  %141 = vmatprep.subr.bf16.mxu0 0
  %142 = vmatpush1.bf16.msra.mxu0 0
  %143 = vmatprep.subr.bf16.mxu0 0
  %144 = vmatpush1.bf16.msra.mxu0 0
  %145 = vmatprep.subr.bf16.mxu0 0
  %146 = vmatpush1.bf16.msra.mxu0 0
  %147 = vmatprep.subr.bf16.mxu0 0
  %148 = vmatpush1.bf16.msra.mxu0 0
  %149 = vmatprep.subr.bf16.mxu0 0
  %150 = vmatpush1.bf16.msra.mxu0 0
  %151 = vmatprep.subr.bf16.mxu0 0
  %152 = vmatpush1.bf16.msra.mxu0 0
  %153 = vmatprep.subr.bf16.mxu0 0
  %154 = vmatpush1.bf16.msra.mxu0 0
  %155 = vmatprep.mubr.bf16.mxu0 0
  %156 = vmatmul.mubr.bf16.gmra.mrb[0].mxu0 %v108
  %v157 = vpop.f32.mrb[0].mxu0
  %v158 = vadd.f32 %v54, %v157
  %v159 = vpop.f32.mrb[0].mxu0
  %v160 = vadd.f32 %v54, %v159
  %v161 = vpop.f32.mrb[0].mxu0
  %v162 = vpop.f32.mrb[0].mxu0
  %163 = vdwg.mxu0
  %164 = vmatprep.subr.bf16.mxu0 %v89
  %165 = vmatpush1.bf16.msra.mxu0 %v88
  %166 = vmatprep.subr.bf16.mxu0 %v93
  %167 = vmatpush1.bf16.msra.mxu0 %v92
  %168 = vmatprep.subr.bf16.mxu0 %v121
  %169 = vmatpush1.bf16.msra.mxu0 %v118
  %170 = vmatprep.subr.bf16.mxu0 0
  %171 = vmatpush1.bf16.msra.mxu0 0
  %172 = vmatprep.subr.bf16.mxu0 0
  %173 = vmatpush1.bf16.msra.mxu0 0
  %174 = vmatprep.subr.bf16.mxu0 0
  %175 = vmatpush1.bf16.msra.mxu0 0
  %176 = vmatprep.subr.bf16.mxu0 0
  %177 = vmatpush1.bf16.msra.mxu0 0
  %178 = vmatprep.subr.bf16.mxu0 0
  %179 = vmatpush1.bf16.msra.mxu0 0
  %180 = vmatprep.subr.bf16.mxu0 0
  %181 = vmatpush1.bf16.msra.mxu0 0
  %182 = vmatprep.subr.bf16.mxu0 0
  %183 = vmatpush1.bf16.msra.mxu0 0
  %184 = vmatprep.subr.bf16.mxu0 0
  %185 = vmatpush1.bf16.msra.mxu0 0
  %186 = vmatprep.subr.bf16.mxu0 0
  %187 = vmatpush1.bf16.msra.mxu0 0
  %188 = vmatprep.subr.bf16.mxu0 0
  %189 = vmatpush1.bf16.msra.mxu0 0
  %190 = vmatprep.subr.bf16.mxu0 0
  %191 = vmatpush1.bf16.msra.mxu0 0
  %192 = vmatprep.subr.bf16.mxu0 0
  %193 = vmatpush1.bf16.msra.mxu0 0
  %194 = vmatprep.subr.bf16.mxu0 0
  %195 = vmatpush1.bf16.msra.mxu0 0
  %196 = vmatprep.mubr.bf16.mxu0 0
  %197 = vmatmul.mubr.bf16.gmra.mrb[0].mxu0 %v108
  %v198 = vpop.f32.mrb[0].mxu0
  %v199 = vadd.f32 %v54, %v198
  %v200 = vpop.f32.mrb[0].mxu0
  %v201 = vadd.f32 %v54, %v200
  %v202 = vpop.f32.mrb[0].mxu0
  %v203 = vpop.f32.mrb[0].mxu0
  %204 = vdwg.mxu0
  %v205 = vmax.f32 %v158, 0.0
  %v206 = vmax.f32 %v160, 0.0
  %v207 = vmax.f32 %v199, 0.0
  %v208 = vmax.f32 %v201, 0.0
  %v209 = vadd.f32 %v205, %v206
  %210 = vadd.xlane.f32.xlu0 %v209
  %v211 = vpop.xlane.xlu0 %210
  %v212 = vmul.f32 %v211, 0.00390625
  %v213 = vld [vmem:[%s3] sm:$0xff]
  %v214 = vmul.f32 %v212, %v213
  %vm215 = vcmask 261120
  %v216 = vsel %vm215, %v214, 0.0
  %v217 = vrot.slane %v216, 4
  %v218 = vadd.f32 %v216, %v217
  %v219 = vrot.slane %v218, 2
  %v220 = vadd.f32 %v218, %v219
  %v221 = vrot.slane %v220, 1
  %v222 = vadd.f32 %v220, %v221
  %v223 = vld [vmem:[%s4] sm:$0x1]
  %v224 = vadd.f32 %v222, %v223
  %v225 = vmax.f32 %v224, 0.0
  %v226 = vadd.f32 %v207, %v208
  %227 = vadd.xlane.f32.xlu0 %v226
  %v228 = vpop.xlane.xlu0 %227
  %v229 = vmul.f32 %v228, 0.00390625
  %v230 = vmul.f32 %v229, %v213
  %v231 = vsel %vm215, %v230, 0.0
  %v232 = vrot.slane %v231, 4
  %v233 = vadd.f32 %v231, %v232
  %v234 = vrot.slane %v233, 2
  %v235 = vadd.f32 %v233, %v234
  %v236 = vrot.slane %v235, 1
  %v237 = vadd.f32 %v235, %v236
  %v238 = vadd.f32 %v237, %v223
  %v239 = vmax.f32 %v238, 0.0
  %v241 = vrot.slane %v239, 7
  %vm243 = vcmask 1040384
  %v244 = vsel %vm243, %v225, %v241
  %v245 = vsel %vm110, %v244, 0.0
  %v246 = vld [vmem:[%s5] sm:$0xff]
  %v247 = vld [vmem:[%s5 + $0x8] sm:$0xff]
  %v248 = vld [vmem:[%s5 + $0x10] sm:$0xff]
  %v249 = vld [vmem:[%s5 + $0x18] sm:$0xff]
  %v250 = vld [vmem:[%s5 + $0x20] sm:$0xff]
  %v251 = vld [vmem:[%s5 + $0x28] sm:$0xff]
  %v252 = vld [vmem:[%s5 + $0x30] sm:$0xff]
  %v253 = vld [vmem:[%s5 + $0x38] sm:$0xff]
  %v254 = vpack.c.bf16 %v246, %v245
  %v255 = vpack.c.bf16 %v248, %v247
  %v256 = vpack.c.bf16 %v250, %v249
  %v257 = vpack.c.bf16 %v252, %v251
  %v258 = vpack.c.bf16 0.0, %v253
  %v259 = vld [vmem:[%s6] sm:$0xff]
  %v260 = vld [vmem:[%s6 + $0x8] sm:$0xff]
  %v261 = vld [vmem:[%s6 + $0x10] sm:$0xff]
  %v262 = vld [vmem:[%s6 + $0x18] sm:$0xff]
  %v263 = vld [vmem:[%s7] sm:$0x3]
  %v265 = vlaneseq
  %v266 = vshrl.u32 %v265, 7
  %v267 = vsub.s32 0, %v266
  %v268 = vrot.slane %v263, %v267
  %v269 = vlaneseq
  %v270 = vshrl.u32 %v269, 7
  %v271 = vsub.s32 1, %v270
  %v272 = vrot.slane %v263, %v271
  %v279 = vunpack.c.l.b16 %v259
  %v280 = vunpack.c.h.b16 %v259
  %v281 = vunpack.c.l.b16 %v260
  %v282 = vunpack.c.h.b16 %v260
  %v283 = vunpack.c.l.b16 %v261
  %v284 = vunpack.c.h.b16 %v261
  %v285 = vunpack.c.l.b16 %v262
  %v286 = vunpack.c.h.b16 %v262
  %v287 = vpack.c.b16 %v281, %v279
  %v288 = vpack.c.b16 %v282, %v280
  %v289 = vpack.c.b16 %v285, %v283
  %v290 = vpack.c.b16 %v286, %v284
  %v296 = vsel %vm215, %v254, 0
  %v299 = vsel %vm215, %v255, 0
  %v302 = vsel %vm215, %v256, 0
  %v305 = vsel %vm215, %v257, 0
  %v308 = vsel %vm215, %v258, 0
  %310 = vmatprep.subr.bf16.mxu0 %v288
  %311 = vmatpush1.bf16.msra.mxu0 %v287
  %312 = vmatprep.subr.bf16.mxu0 %v290
  %313 = vmatpush1.bf16.msra.mxu0 %v289
  %314 = vmatprep.subr.bf16.mxu0 0
  %315 = vmatpush1.bf16.msra.mxu0 0
  %316 = vmatprep.subr.bf16.mxu0 0
  %317 = vmatpush1.bf16.msra.mxu0 0
  %318 = vmatprep.subr.bf16.mxu0 0
  %319 = vmatpush1.bf16.msra.mxu0 0
  %320 = vmatprep.subr.bf16.mxu0 0
  %321 = vmatpush1.bf16.msra.mxu0 0
  %322 = vmatprep.subr.bf16.mxu0 0
  %323 = vmatpush1.bf16.msra.mxu0 0
  %324 = vmatprep.subr.bf16.mxu0 0
  %325 = vmatpush1.bf16.msra.mxu0 0
  %326 = vmatprep.subr.bf16.mxu0 0
  %327 = vmatpush1.bf16.msra.mxu0 0
  %328 = vmatprep.subr.bf16.mxu0 0
  %329 = vmatpush1.bf16.msra.mxu0 0
  %330 = vmatprep.subr.bf16.mxu0 0
  %331 = vmatpush1.bf16.msra.mxu0 0
  %332 = vmatprep.subr.bf16.mxu0 0
  %333 = vmatpush1.bf16.msra.mxu0 0
  %334 = vmatprep.subr.bf16.mxu0 0
  %335 = vmatpush1.bf16.msra.mxu0 0
  %336 = vmatprep.subr.bf16.mxu0 0
  %337 = vmatpush1.bf16.msra.mxu0 0
  %338 = vmatprep.subr.bf16.mxu0 0
  %339 = vmatpush1.bf16.msra.mxu0 0
  %340 = vmatprep.subr.bf16.mxu0 0
  %341 = vmatpush1.bf16.msra.mxu0 0
  %342 = vmatprep.mubr.bf16.mxu0 0
  %343 = vmatmul.mubr.bf16.gmra.mrb[0].mxu0 %v296
  %v344 = vpop.f32.mrb[0].mxu0
  %v345 = vadd.f32 %v268, %v344
  %v346 = vpop.f32.mrb[0].mxu0
  %v347 = vadd.f32 %v272, %v346
  %v348 = vpop.f32.mrb[0].mxu0
  %v349 = vadd.f32 %v268, %v348
  %v350 = vpop.f32.mrb[0].mxu0
  %v351 = vadd.f32 %v272, %v350
  %352 = vmatprep.mubr.bf16.mxu0 0
  %353 = vmatmul.mubr.bf16.gmra.mrb[0].mxu0 %v299
  %v354 = vpop.f32.mrb[0].mxu0
  %v355 = vadd.f32 %v268, %v354
  %v356 = vpop.f32.mrb[0].mxu0
  %v357 = vadd.f32 %v272, %v356
  %v358 = vpop.f32.mrb[0].mxu0
  %v359 = vadd.f32 %v268, %v358
  %v360 = vpop.f32.mrb[0].mxu0
  %v361 = vadd.f32 %v272, %v360
  %362 = vmatprep.mubr.bf16.mxu0 0
  %363 = vmatmul.mubr.bf16.gmra.mrb[0].mxu0 %v302
  %v364 = vpop.f32.mrb[0].mxu0
  %v365 = vadd.f32 %v268, %v364
  %v366 = vpop.f32.mrb[0].mxu0
  %v367 = vadd.f32 %v272, %v366
  %v368 = vpop.f32.mrb[0].mxu0
  %v369 = vadd.f32 %v268, %v368
  %v370 = vpop.f32.mrb[0].mxu0
  %v371 = vadd.f32 %v272, %v370
  %372 = vmatprep.mubr.bf16.mxu0 0
  %373 = vmatmul.mubr.bf16.gmra.mrb[0].mxu0 %v305
  %v374 = vpop.f32.mrb[0].mxu0
  %v375 = vadd.f32 %v268, %v374
  %v376 = vpop.f32.mrb[0].mxu0
  %v377 = vadd.f32 %v272, %v376
  %v378 = vpop.f32.mrb[0].mxu0
  %v379 = vadd.f32 %v268, %v378
  %v380 = vpop.f32.mrb[0].mxu0
  %v381 = vadd.f32 %v272, %v380
  %382 = vmatprep.mubr.bf16.mxu0 0
  %383 = vmatmul.mubr.bf16.gmra.mrb[0].mxu0 %v308
  %v384 = vpop.f32.mrb[0].mxu0
  %v385 = vadd.f32 %v268, %v384
  %v386 = vpop.f32.mrb[0].mxu0
  %v387 = vadd.f32 %v272, %v386
  %v388 = vpop.f32.mrb[0].mxu0
  %v389 = vadd.f32 %v268, %v388
  %v390 = vpop.f32.mrb[0].mxu0
  %v391 = vadd.f32 %v272, %v390
  %392 = vdwg.mxu0
  %393 = vst [vmem:[#allocation2] sm:$0xff] %v345
  %394 = vst [vmem:[#allocation2 + $0x8] sm:$0xff] %v347
  %395 = vst [vmem:[#allocation2 + $0x10] sm:$0xff] %v349
  %396 = vst [vmem:[#allocation2 + $0x18] sm:$0xff] %v351
  %397 = vst [vmem:[#allocation2 + $0x20] sm:$0xff] %v355
  %398 = vst [vmem:[#allocation2 + $0x28] sm:$0xff] %v357
  %399 = vst [vmem:[#allocation2 + $0x30] sm:$0xff] %v359
  %400 = vst [vmem:[#allocation2 + $0x38] sm:$0xff] %v361
  %401 = vst [vmem:[#allocation2 + $0x40] sm:$0xff] %v365
  %402 = vst [vmem:[#allocation2 + $0x48] sm:$0xff] %v367
  %403 = vst [vmem:[#allocation2 + $0x50] sm:$0xff] %v369
  %404 = vst [vmem:[#allocation2 + $0x58] sm:$0xff] %v371
  %405 = vst [vmem:[#allocation2 + $0x60] sm:$0xff] %v375
  %406 = vst [vmem:[#allocation2 + $0x68] sm:$0xff] %v377
  %407 = vst [vmem:[#allocation2 + $0x70] sm:$0xff] %v379
  %408 = vst [vmem:[#allocation2 + $0x78] sm:$0xff] %v381
  %409 = vst [vmem:[#allocation2 + $0x80] sm:$0xff] %v385
  %410 = vst [vmem:[#allocation2 + $0x88] sm:$0xff] %v387
  %411 = vst [vmem:[#allocation2 + $0x90] sm:$0xff] %v389
  %412 = vst [vmem:[#allocation2 + $0x98] sm:$0xff] %v391
  %v413 = vlaneseq
  %v414 = vand.u32 %v413, 127
  %v415 = vadd.s32 %v414, 128
  %vm416 = vcmp.lt.s32.totalorder %v414, 160
  %vm417 = vcmp.lt.s32.totalorder %v415, 160
  %vm418 = vcmp.ge.s32.totalorder %v414, 192
  %vm419 = vcmp.ge.s32.totalorder %v415, 192
  %vm420 = vmor %vm416, %vm418
  %vm421 = vmor %vm417, %vm419
  %v422 = vld [vmem:[#allocation2] sm:$0xff]
  %v423 = vld [vmem:[#allocation2 + $0x8] sm:$0xff]
  %v424 = vsel %vm420, %v422, 0.0
  %v425 = vsel %vm421, %v423, 0.0
  %v426 = vxor.u32 %v424, 2147483648
  %v427 = vxor.u32 %v425, 2147483648
  %v428 = vmul.f32 %v426, 1.442695
  %v429 = vpow.pop %v428
  %v430 = vmul.f32 %v427, 1.442695
  %v431 = vpow.pop %v430
  %v432 = vadd.f32 %v429, 1.0
  %v433 = vadd.f32 %v431, 1.0
  %v434 = vrcp.pop %v432
  %v435 = vmul.f32 1.0, %v434
  %v436 = vrcp.pop %v433
  %v437 = vmul.f32 1.0, %v436
  %v438 = vtanh.pop %v425
  %v439 = vmul.f32 %v435, 0.0
  %v440 = vmul.f32 %v435, %v438
  %442 = vrot.lane.b32.xlu0 %v440, 64
  %v443 = vpop.permute.xlu0 %442
  %v445 = vadd.f32 %v439, %v443
  %v446 = vtanh.pop %v445
  %v447 = vmul.f32 %v437, %v446
  %v448 = vpack.c.bf16 %v447, %v447
  %v449 = vld [vmem:[%s8] sm:$0xff]
  %v450 = vld [vmem:[%s8 + $0x8] sm:$0xff]
  %v451 = vld [vmem:[%s8 + $0x10] sm:$0xff]
  %v452 = vld [vmem:[%s8 + $0x18] sm:$0xff]
  %v453 = vld [vmem:[%s8 + $0x20] sm:$0xff]
  %v454 = vld [vmem:[%s8 + $0x28] sm:$0xff]
  %v455 = vld [vmem:[%s8 + $0x30] sm:$0xff]
  %v456 = vld [vmem:[%s8 + $0x38] sm:$0xff]
  %v457 = vld [vmem:[#allocation2 + $0x10] sm:$0xff]
  %v458 = vld [vmem:[#allocation2 + $0x18] sm:$0xff]
  %460 = vrot.lane.b32.xlu0 %v448, 64
  %v461 = vpop.permute.xlu0 %460
  %v470 = vunpack.c.l.b16 %v449
  %v471 = vunpack.c.h.b16 %v449
  %v472 = vunpack.c.l.b16 %v450
  %v473 = vunpack.c.h.b16 %v450
  %v474 = vunpack.c.l.b16 %v451
  %v475 = vunpack.c.h.b16 %v451
  %v476 = vunpack.c.l.b16 %v452
  %v477 = vunpack.c.h.b16 %v452
  %v478 = vunpack.c.l.b16 %v453
  %v479 = vunpack.c.h.b16 %v453
  %v480 = vunpack.c.l.b16 %v454
  %v481 = vunpack.c.h.b16 %v454
  %v482 = vunpack.c.l.b16 %v455
  %v483 = vunpack.c.h.b16 %v455
  %v484 = vunpack.c.l.b16 %v456
  %v485 = vunpack.c.h.b16 %v456
  %v486 = vpack.c.b16 %v472, %v470
  %v487 = vpack.c.b16 %v473, %v471
  %v488 = vpack.c.b16 %v476, %v474
  %v489 = vpack.c.b16 %v477, %v475
  %v490 = vpack.c.b16 %v480, %v478
  %v491 = vpack.c.b16 %v481, %v479
  %v492 = vpack.c.b16 %v484, %v482
  %v493 = vpack.c.b16 %v485, %v483
  %vm502 = vcmask 523264
  %v504 = vsel %vm502, %v461, 0
  %506 = vmatprep.subr.bf16.mxu0 %v487
  %507 = vmatpush1.bf16.msra.mxu0 %v486
  %508 = vmatprep.subr.bf16.mxu0 %v489
  %509 = vmatpush1.bf16.msra.mxu0 %v488
  %510 = vmatprep.subr.bf16.mxu0 %v491
  %511 = vmatpush1.bf16.msra.mxu0 %v490
  %512 = vmatprep.subr.bf16.mxu0 %v493
  %513 = vmatpush1.bf16.msra.mxu0 %v492
  %514 = vmatprep.subr.bf16.mxu0 0
  %515 = vmatpush1.bf16.msra.mxu0 0
  %516 = vmatprep.subr.bf16.mxu0 0
  %517 = vmatpush1.bf16.msra.mxu0 0
  %518 = vmatprep.subr.bf16.mxu0 0
  %519 = vmatpush1.bf16.msra.mxu0 0
  %520 = vmatprep.subr.bf16.mxu0 0
  %521 = vmatpush1.bf16.msra.mxu0 0
  %522 = vmatprep.subr.bf16.mxu0 0
  %523 = vmatpush1.bf16.msra.mxu0 0
  %524 = vmatprep.subr.bf16.mxu0 0
  %525 = vmatpush1.bf16.msra.mxu0 0
  %526 = vmatprep.subr.bf16.mxu0 0
  %527 = vmatpush1.bf16.msra.mxu0 0
  %528 = vmatprep.subr.bf16.mxu0 0
  %529 = vmatpush1.bf16.msra.mxu0 0
  %530 = vmatprep.subr.bf16.mxu0 0
  %531 = vmatpush1.bf16.msra.mxu0 0
  %532 = vmatprep.subr.bf16.mxu0 0
  %533 = vmatpush1.bf16.msra.mxu0 0
  %534 = vmatprep.subr.bf16.mxu0 0
  %535 = vmatpush1.bf16.msra.mxu0 0
  %536 = vmatprep.subr.bf16.mxu0 0
  %537 = vmatpush1.bf16.msra.mxu0 0
  %538 = vmatprep.mubr.bf16.mxu0 0
  %539 = vmatmul.mubr.bf16.gmra.mrb[0].mxu0 %v504
  %v540 = vpop.f32.mrb[0].mxu0
  %v541 = vadd.f32 %v457, %v540
  %v542 = vpop.f32.mrb[0].mxu0
  %v543 = vadd.f32 %v458, %v542
  %v544 = vpop.f32.mrb[0].mxu0
  %v545 = vpop.f32.mrb[0].mxu0
  %546 = vdwg.mxu0
  %v547 = vxor.u32 %v541, 2147483648
  %v548 = vxor.u32 %v543, 2147483648
  %v549 = vmul.f32 %v547, 1.442695
  %v550 = vpow.pop %v549
  %v551 = vmul.f32 %v548, 1.442695
  %v552 = vpow.pop %v551
  %v553 = vadd.f32 %v550, 1.0
  %v554 = vadd.f32 %v552, 1.0
  %v555 = vrcp.pop %v553
  %v556 = vmul.f32 1.0, %v555
  %v557 = vrcp.pop %v554
  %v558 = vmul.f32 1.0, %v557
  %v559 = vtanh.pop %v543
  %v560 = vmul.f32 %v556, %v445
  %v561 = vmul.f32 %v556, %v559
  %563 = vrot.lane.b32.xlu0 %v561, 64
  %v564 = vpop.permute.xlu0 %563
  %v566 = vadd.f32 %v560, %v564
  %v567 = vtanh.pop %v566
  %v568 = vmul.f32 %v558, %v567
  %v569 = vpack.c.bf16 %v568, %v568
  %v570 = vld [vmem:[%s9] sm:$0xf]
  %v571 = vld [vmem:[%s9 + $0x4] sm:$0xf]
  %v572 = vld [vmem:[%s9 + $0x8] sm:$0xf]
  %v573 = vld [vmem:[%s9 + $0xc] sm:$0xf]
  %v574 = vld [vmem:[%s10] sm:$0x1]
  %v576 = vlaneseq
  %v577 = vshrl.u32 %v576, 7
  %v578 = vsub.s32 0, %v577
  %v579 = vrot.slane %v574, %v578
  %582 = vrot.lane.b32.xlu0 %v569, 32
  %v583 = vpop.permute.xlu0 %582
  %v588 = vunpack.c.l.b16 %v570
  %v589 = vunpack.c.l.b16 %v571
  %v590 = vunpack.c.l.b16 %v572
  %v591 = vunpack.c.l.b16 %v573
  %v592 = vpack.c.b16 %v589, %v588
  %v593 = vpack.c.b16 %v591, %v590
  %v597 = vsel %vm215, %v583, 0
  %599 = vmatprep.subr.bf16.mxu0 0
  %600 = vmatpush1.bf16.msra.mxu0 %v592
  %601 = vmatprep.subr.bf16.mxu0 0
  %602 = vmatpush1.bf16.msra.mxu0 %v593
  %603 = vmatprep.subr.bf16.mxu0 0
  %604 = vmatpush1.bf16.msra.mxu0 0
  %605 = vmatprep.subr.bf16.mxu0 0
  %606 = vmatpush1.bf16.msra.mxu0 0
  %607 = vmatprep.subr.bf16.mxu0 0
  %608 = vmatpush1.bf16.msra.mxu0 0
  %609 = vmatprep.subr.bf16.mxu0 0
  %610 = vmatpush1.bf16.msra.mxu0 0
  %611 = vmatprep.subr.bf16.mxu0 0
  %612 = vmatpush1.bf16.msra.mxu0 0
  %613 = vmatprep.subr.bf16.mxu0 0
  %614 = vmatpush1.bf16.msra.mxu0 0
  %615 = vmatprep.subr.bf16.mxu0 0
  %616 = vmatpush1.bf16.msra.mxu0 0
  %617 = vmatprep.subr.bf16.mxu0 0
  %618 = vmatpush1.bf16.msra.mxu0 0
  %619 = vmatprep.subr.bf16.mxu0 0
  %620 = vmatpush1.bf16.msra.mxu0 0
  %621 = vmatprep.subr.bf16.mxu0 0
  %622 = vmatpush1.bf16.msra.mxu0 0
  %623 = vmatprep.subr.bf16.mxu0 0
  %624 = vmatpush1.bf16.msra.mxu0 0
  %625 = vmatprep.subr.bf16.mxu0 0
  %626 = vmatpush1.bf16.msra.mxu0 0
  %627 = vmatprep.subr.bf16.mxu0 0
  %628 = vmatpush1.bf16.msra.mxu0 0
  %629 = vmatprep.subr.bf16.mxu0 0
  %630 = vmatpush1.bf16.msra.mxu0 0
  %631 = vmatprep.mubr.bf16.mxu0 0
  %632 = vmatmul.mubr.bf16.gmra.mrb[0].mxu0 %v597
  %v633 = vpop.f32.mrb[0].mxu0
  %v634 = vadd.f32 %v579, %v633
  %v635 = vpop.f32.mrb[0].mxu0
  %v636 = vpop.f32.mrb[0].mxu0
  %v637 = vpop.f32.mrb[0].mxu0
  %638 = vdwg.mxu0
  %639 = vst [vmem:[%s11] sm:$0xff] %v634
  %v640 = vld [vmem:[%s8] sm:$0xff]
  %v641 = vld [vmem:[%s8 + $0x8] sm:$0xff]
  %v642 = vld [vmem:[%s8 + $0x10] sm:$0xff]
  %v643 = vld [vmem:[%s8 + $0x18] sm:$0xff]
  %v644 = vld [vmem:[%s8 + $0x20] sm:$0xff]
  %v645 = vld [vmem:[%s8 + $0x28] sm:$0xff]
  %v646 = vld [vmem:[%s8 + $0x30] sm:$0xff]
  %v647 = vld [vmem:[%s8 + $0x38] sm:$0xff]
  %v648 = vld [vmem:[#allocation2 + $0x20] sm:$0xff]
  %v649 = vld [vmem:[#allocation2 + $0x28] sm:$0xff]
  %650 = vrot.lane.b32.xlu0 %v569, 64
  %v651 = vpop.permute.xlu0 %650
  %v660 = vunpack.c.l.b16 %v640
  %v661 = vunpack.c.h.b16 %v640
  %v662 = vunpack.c.l.b16 %v641
  %v663 = vunpack.c.h.b16 %v641
  %v664 = vunpack.c.l.b16 %v642
  %v665 = vunpack.c.h.b16 %v642
  %v666 = vunpack.c.l.b16 %v643
  %v667 = vunpack.c.h.b16 %v643
  %v668 = vunpack.c.l.b16 %v644
  %v669 = vunpack.c.h.b16 %v644
  %v670 = vunpack.c.l.b16 %v645
  %v671 = vunpack.c.h.b16 %v645
  %v672 = vunpack.c.l.b16 %v646
  %v673 = vunpack.c.h.b16 %v646
  %v674 = vunpack.c.l.b16 %v647
  %v675 = vunpack.c.h.b16 %v647
  %v676 = vpack.c.b16 %v662, %v660
  %v677 = vpack.c.b16 %v663, %v661
  %v678 = vpack.c.b16 %v666, %v664
  %v679 = vpack.c.b16 %v667, %v665
  %v680 = vpack.c.b16 %v670, %v668
  %v681 = vpack.c.b16 %v671, %v669
  %v682 = vpack.c.b16 %v674, %v672
  %v683 = vpack.c.b16 %v675, %v673
  %v693 = vsel %vm502, %v651, 0
  %695 = vmatprep.subr.bf16.mxu0 %v677
  %696 = vmatpush1.bf16.msra.mxu0 %v676
  %697 = vmatprep.subr.bf16.mxu0 %v679
  %698 = vmatpush1.bf16.msra.mxu0 %v678
  %699 = vmatprep.subr.bf16.mxu0 %v681
  %700 = vmatpush1.bf16.msra.mxu0 %v680
  %701 = vmatprep.subr.bf16.mxu0 %v683
  %702 = vmatpush1.bf16.msra.mxu0 %v682
  %703 = vmatprep.subr.bf16.mxu0 0
  %704 = vmatpush1.bf16.msra.mxu0 0
  %705 = vmatprep.subr.bf16.mxu0 0
  %706 = vmatpush1.bf16.msra.mxu0 0
  %707 = vmatprep.subr.bf16.mxu0 0
  %708 = vmatpush1.bf16.msra.mxu0 0
  %709 = vmatprep.subr.bf16.mxu0 0
  %710 = vmatpush1.bf16.msra.mxu0 0
  %711 = vmatprep.subr.bf16.mxu0 0
  %712 = vmatpush1.bf16.msra.mxu0 0
  %713 = vmatprep.subr.bf16.mxu0 0
  %714 = vmatpush1.bf16.msra.mxu0 0
  %715 = vmatprep.subr.bf16.mxu0 0
  %716 = vmatpush1.bf16.msra.mxu0 0
  %717 = vmatprep.subr.bf16.mxu0 0
  %718 = vmatpush1.bf16.msra.mxu0 0
  %719 = vmatprep.subr.bf16.mxu0 0
  %720 = vmatpush1.bf16.msra.mxu0 0
  %721 = vmatprep.subr.bf16.mxu0 0
  %722 = vmatpush1.bf16.msra.mxu0 0
  %723 = vmatprep.subr.bf16.mxu0 0
  %724 = vmatpush1.bf16.msra.mxu0 0
  %725 = vmatprep.subr.bf16.mxu0 0
  %726 = vmatpush1.bf16.msra.mxu0 0
  %727 = vmatprep.mubr.bf16.mxu0 0
  %728 = vmatmul.mubr.bf16.gmra.mrb[0].mxu0 %v693
  %v729 = vpop.f32.mrb[0].mxu0
  %v730 = vadd.f32 %v648, %v729
  %v731 = vpop.f32.mrb[0].mxu0
  %v732 = vadd.f32 %v649, %v731
  %v733 = vpop.f32.mrb[0].mxu0
  %v734 = vpop.f32.mrb[0].mxu0
  %735 = vdwg.mxu0
  %v736 = vxor.u32 %v730, 2147483648
  %v737 = vxor.u32 %v732, 2147483648
  %v738 = vmul.f32 %v736, 1.442695
  %v739 = vpow.pop %v738
  %v740 = vmul.f32 %v737, 1.442695
  %v741 = vpow.pop %v740
  %v742 = vadd.f32 %v739, 1.0
  %v743 = vadd.f32 %v741, 1.0
  %v744 = vrcp.pop %v742
  %v745 = vmul.f32 1.0, %v744
  %v746 = vrcp.pop %v743
  %v747 = vmul.f32 1.0, %v746
  %v748 = vtanh.pop %v732
  %v749 = vmul.f32 %v745, %v566
  %v750 = vmul.f32 %v745, %v748
  %752 = vrot.lane.b32.xlu0 %v750, 64
  %v753 = vpop.permute.xlu0 %752
  %v755 = vadd.f32 %v749, %v753
  %v756 = vtanh.pop %v755
  %v757 = vmul.f32 %v747, %v756
  %v758 = vpack.c.bf16 %v757, %v757
  %v759 = vld [vmem:[%s9] sm:$0xf]
  %v760 = vld [vmem:[%s9 + $0x4] sm:$0xf]
  %v761 = vld [vmem:[%s9 + $0x8] sm:$0xf]
  %v762 = vld [vmem:[%s9 + $0xc] sm:$0xf]
  %v763 = vld [vmem:[%s10] sm:$0x1]
  %v765 = vlaneseq
  %v766 = vshrl.u32 %v765, 7
  %v767 = vsub.s32 0, %v766
  %v768 = vrot.slane %v763, %v767
  %771 = vrot.lane.b32.xlu0 %v758, 32
  %v772 = vpop.permute.xlu0 %771
  %v777 = vunpack.c.l.b16 %v759
  %v778 = vunpack.c.l.b16 %v760
  %v779 = vunpack.c.l.b16 %v761
  %v780 = vunpack.c.l.b16 %v762
  %v781 = vpack.c.b16 %v778, %v777
  %v782 = vpack.c.b16 %v780, %v779
  %v786 = vsel %vm215, %v772, 0
  %788 = vmatprep.subr.bf16.mxu0 0
  %789 = vmatpush1.bf16.msra.mxu0 %v781
  %790 = vmatprep.subr.bf16.mxu0 0
  %791 = vmatpush1.bf16.msra.mxu0 %v782
  %792 = vmatprep.subr.bf16.mxu0 0
  %793 = vmatpush1.bf16.msra.mxu0 0
  %794 = vmatprep.subr.bf16.mxu0 0
  %795 = vmatpush1.bf16.msra.mxu0 0
  %796 = vmatprep.subr.bf16.mxu0 0
  %797 = vmatpush1.bf16.msra.mxu0 0
  %798 = vmatprep.subr.bf16.mxu0 0
  %799 = vmatpush1.bf16.msra.mxu0 0
  %800 = vmatprep.subr.bf16.mxu0 0
  %801 = vmatpush1.bf16.msra.mxu0 0
  %802 = vmatprep.subr.bf16.mxu0 0
  %803 = vmatpush1.bf16.msra.mxu0 0
  %804 = vmatprep.subr.bf16.mxu0 0
  %805 = vmatpush1.bf16.msra.mxu0 0
  %806 = vmatprep.subr.bf16.mxu0 0
  %807 = vmatpush1.bf16.msra.mxu0 0
  %808 = vmatprep.subr.bf16.mxu0 0
  %809 = vmatpush1.bf16.msra.mxu0 0
  %810 = vmatprep.subr.bf16.mxu0 0
  %811 = vmatpush1.bf16.msra.mxu0 0
  %812 = vmatprep.subr.bf16.mxu0 0
  %813 = vmatpush1.bf16.msra.mxu0 0
  %814 = vmatprep.subr.bf16.mxu0 0
  %815 = vmatpush1.bf16.msra.mxu0 0
  %816 = vmatprep.subr.bf16.mxu0 0
  %817 = vmatpush1.bf16.msra.mxu0 0
  %818 = vmatprep.subr.bf16.mxu0 0
  %819 = vmatpush1.bf16.msra.mxu0 0
  %820 = vmatprep.mubr.bf16.mxu0 0
  %821 = vmatmul.mubr.bf16.gmra.mrb[0].mxu0 %v786
  %v822 = vpop.f32.mrb[0].mxu0
  %v823 = vadd.f32 %v768, %v822
  %v824 = vpop.f32.mrb[0].mxu0
  %v825 = vpop.f32.mrb[0].mxu0
  %v826 = vpop.f32.mrb[0].mxu0
  %827 = vdwg.mxu0
  %828 = vst [vmem:[%s11 + $0x8] sm:$0xff] %v823
  %v829 = vld [vmem:[%s8] sm:$0xff]
  %v830 = vld [vmem:[%s8 + $0x8] sm:$0xff]
  %v831 = vld [vmem:[%s8 + $0x10] sm:$0xff]
  %v832 = vld [vmem:[%s8 + $0x18] sm:$0xff]
  %v833 = vld [vmem:[%s8 + $0x20] sm:$0xff]
  %v834 = vld [vmem:[%s8 + $0x28] sm:$0xff]
  %v835 = vld [vmem:[%s8 + $0x30] sm:$0xff]
  %v836 = vld [vmem:[%s8 + $0x38] sm:$0xff]
  %v837 = vld [vmem:[#allocation2 + $0x30] sm:$0xff]
  %v838 = vld [vmem:[#allocation2 + $0x38] sm:$0xff]
  %839 = vrot.lane.b32.xlu0 %v758, 64
  %v840 = vpop.permute.xlu0 %839
  %v849 = vunpack.c.l.b16 %v829
  %v850 = vunpack.c.h.b16 %v829
  %v851 = vunpack.c.l.b16 %v830
  %v852 = vunpack.c.h.b16 %v830
  %v853 = vunpack.c.l.b16 %v831
  %v854 = vunpack.c.h.b16 %v831
  %v855 = vunpack.c.l.b16 %v832
  %v856 = vunpack.c.h.b16 %v832
  %v857 = vunpack.c.l.b16 %v833
  %v858 = vunpack.c.h.b16 %v833
  %v859 = vunpack.c.l.b16 %v834
  %v860 = vunpack.c.h.b16 %v834
  %v861 = vunpack.c.l.b16 %v835
  %v862 = vunpack.c.h.b16 %v835
  %v863 = vunpack.c.l.b16 %v836
  %v864 = vunpack.c.h.b16 %v836
  %v865 = vpack.c.b16 %v851, %v849
  %v866 = vpack.c.b16 %v852, %v850
  %v867 = vpack.c.b16 %v855, %v853
  %v868 = vpack.c.b16 %v856, %v854
  %v869 = vpack.c.b16 %v859, %v857
  %v870 = vpack.c.b16 %v860, %v858
  %v871 = vpack.c.b16 %v863, %v861
  %v872 = vpack.c.b16 %v864, %v862
  %v882 = vsel %vm502, %v840, 0
  %884 = vmatprep.subr.bf16.mxu0 %v866
  %885 = vmatpush1.bf16.msra.mxu0 %v865
  %886 = vmatprep.subr.bf16.mxu0 %v868
  %887 = vmatpush1.bf16.msra.mxu0 %v867
  %888 = vmatprep.subr.bf16.mxu0 %v870
  %889 = vmatpush1.bf16.msra.mxu0 %v869
  %890 = vmatprep.subr.bf16.mxu0 %v872
  %891 = vmatpush1.bf16.msra.mxu0 %v871
  %892 = vmatprep.subr.bf16.mxu0 0
  %893 = vmatpush1.bf16.msra.mxu0 0
  %894 = vmatprep.subr.bf16.mxu0 0
  %895 = vmatpush1.bf16.msra.mxu0 0
  %896 = vmatprep.subr.bf16.mxu0 0
  %897 = vmatpush1.bf16.msra.mxu0 0
  %898 = vmatprep.subr.bf16.mxu0 0
  %899 = vmatpush1.bf16.msra.mxu0 0
  %900 = vmatprep.subr.bf16.mxu0 0
  %901 = vmatpush1.bf16.msra.mxu0 0
  %902 = vmatprep.subr.bf16.mxu0 0
  %903 = vmatpush1.bf16.msra.mxu0 0
  %904 = vmatprep.subr.bf16.mxu0 0
  %905 = vmatpush1.bf16.msra.mxu0 0
  %906 = vmatprep.subr.bf16.mxu0 0
  %907 = vmatpush1.bf16.msra.mxu0 0
  %908 = vmatprep.subr.bf16.mxu0 0
  %909 = vmatpush1.bf16.msra.mxu0 0
  %910 = vmatprep.subr.bf16.mxu0 0
  %911 = vmatpush1.bf16.msra.mxu0 0
  %912 = vmatprep.subr.bf16.mxu0 0
  %913 = vmatpush1.bf16.msra.mxu0 0
  %914 = vmatprep.subr.bf16.mxu0 0
  %915 = vmatpush1.bf16.msra.mxu0 0
  %916 = vmatprep.mubr.bf16.mxu0 0
  %917 = vmatmul.mubr.bf16.gmra.mrb[0].mxu0 %v882
  %v918 = vpop.f32.mrb[0].mxu0
  %v919 = vadd.f32 %v837, %v918
  %v920 = vpop.f32.mrb[0].mxu0
  %v921 = vadd.f32 %v838, %v920
  %v922 = vpop.f32.mrb[0].mxu0
  %v923 = vpop.f32.mrb[0].mxu0
  %924 = vdwg.mxu0
  %v925 = vxor.u32 %v919, 2147483648
  %v926 = vxor.u32 %v921, 2147483648
  %v927 = vmul.f32 %v925, 1.442695
  %v928 = vpow.pop %v927
  %v929 = vmul.f32 %v926, 1.442695
  %v930 = vpow.pop %v929
  %v931 = vadd.f32 %v928, 1.0
  %v932 = vadd.f32 %v930, 1.0
  %v933 = vrcp.pop %v931
  %v934 = vmul.f32 1.0, %v933
  %v935 = vrcp.pop %v932
  %v936 = vmul.f32 1.0, %v935
  %v937 = vtanh.pop %v921
  %v938 = vmul.f32 %v934, %v755
  %v939 = vmul.f32 %v934, %v937
  %941 = vrot.lane.b32.xlu0 %v939, 64
  %v942 = vpop.permute.xlu0 %941
  %v944 = vadd.f32 %v938, %v942
  %v945 = vtanh.pop %v944
  %v946 = vmul.f32 %v936, %v945
  %v947 = vpack.c.bf16 %v946, %v946
  %v948 = vld [vmem:[%s9] sm:$0xf]
  %v949 = vld [vmem:[%s9 + $0x4] sm:$0xf]
  %v950 = vld [vmem:[%s9 + $0x8] sm:$0xf]
  %v951 = vld [vmem:[%s9 + $0xc] sm:$0xf]
  %v952 = vld [vmem:[%s10] sm:$0x1]
  %v954 = vlaneseq
  %v955 = vshrl.u32 %v954, 7
  %v956 = vsub.s32 0, %v955
  %v957 = vrot.slane %v952, %v956
  %960 = vrot.lane.b32.xlu0 %v947, 32
  %v961 = vpop.permute.xlu0 %960
  %v966 = vunpack.c.l.b16 %v948
  %v967 = vunpack.c.l.b16 %v949
  %v968 = vunpack.c.l.b16 %v950
  %v969 = vunpack.c.l.b16 %v951
  %v970 = vpack.c.b16 %v967, %v966
  %v971 = vpack.c.b16 %v969, %v968
  %v975 = vsel %vm215, %v961, 0
  %977 = vmatprep.subr.bf16.mxu0 0
  %978 = vmatpush1.bf16.msra.mxu0 %v970
  %979 = vmatprep.subr.bf16.mxu0 0
  %980 = vmatpush1.bf16.msra.mxu0 %v971
  %981 = vmatprep.subr.bf16.mxu0 0
  %982 = vmatpush1.bf16.msra.mxu0 0
  %983 = vmatprep.subr.bf16.mxu0 0
  %984 = vmatpush1.bf16.msra.mxu0 0
  %985 = vmatprep.subr.bf16.mxu0 0
  %986 = vmatpush1.bf16.msra.mxu0 0
  %987 = vmatprep.subr.bf16.mxu0 0
  %988 = vmatpush1.bf16.msra.mxu0 0
  %989 = vmatprep.subr.bf16.mxu0 0
  %990 = vmatpush1.bf16.msra.mxu0 0
  %991 = vmatprep.subr.bf16.mxu0 0
  %992 = vmatpush1.bf16.msra.mxu0 0
  %993 = vmatprep.subr.bf16.mxu0 0
  %994 = vmatpush1.bf16.msra.mxu0 0
  %995 = vmatprep.subr.bf16.mxu0 0
  %996 = vmatpush1.bf16.msra.mxu0 0
  %997 = vmatprep.subr.bf16.mxu0 0
  %998 = vmatpush1.bf16.msra.mxu0 0
  %999 = vmatprep.subr.bf16.mxu0 0
  %1000 = vmatpush1.bf16.msra.mxu0 0
  %1001 = vmatprep.subr.bf16.mxu0 0
  %1002 = vmatpush1.bf16.msra.mxu0 0
  %1003 = vmatprep.subr.bf16.mxu0 0
  %1004 = vmatpush1.bf16.msra.mxu0 0
  %1005 = vmatprep.subr.bf16.mxu0 0
  %1006 = vmatpush1.bf16.msra.mxu0 0
  %1007 = vmatprep.subr.bf16.mxu0 0
  %1008 = vmatpush1.bf16.msra.mxu0 0
  %1009 = vmatprep.mubr.bf16.mxu0 0
  %1010 = vmatmul.mubr.bf16.gmra.mrb[0].mxu0 %v975
  %v1011 = vpop.f32.mrb[0].mxu0
  %v1012 = vadd.f32 %v957, %v1011
  %v1013 = vpop.f32.mrb[0].mxu0
  %v1014 = vpop.f32.mrb[0].mxu0
  %v1015 = vpop.f32.mrb[0].mxu0
  %1016 = vdwg.mxu0
  %1017 = vst [vmem:[%s11 + $0x10] sm:$0xff] %v1012
  %v1018 = vld [vmem:[%s8] sm:$0xff]
  %v1019 = vld [vmem:[%s8 + $0x8] sm:$0xff]
  %v1020 = vld [vmem:[%s8 + $0x10] sm:$0xff]
  %v1021 = vld [vmem:[%s8 + $0x18] sm:$0xff]
  %v1022 = vld [vmem:[%s8 + $0x20] sm:$0xff]
  %v1023 = vld [vmem:[%s8 + $0x28] sm:$0xff]
  %v1024 = vld [vmem:[%s8 + $0x30] sm:$0xff]
  %v1025 = vld [vmem:[%s8 + $0x38] sm:$0xff]
  %v1026 = vld [vmem:[#allocation2 + $0x40] sm:$0xff]
  %v1027 = vld [vmem:[#allocation2 + $0x48] sm:$0xff]
  %1028 = vrot.lane.b32.xlu0 %v947, 64
  %v1029 = vpop.permute.xlu0 %1028
  %v1038 = vunpack.c.l.b16 %v1018
  %v1039 = vunpack.c.h.b16 %v1018
  %v1040 = vunpack.c.l.b16 %v1019
  %v1041 = vunpack.c.h.b16 %v1019
  %v1042 = vunpack.c.l.b16 %v1020
  %v1043 = vunpack.c.h.b16 %v1020
  %v1044 = vunpack.c.l.b16 %v1021
  %v1045 = vunpack.c.h.b16 %v1021
  %v1046 = vunpack.c.l.b16 %v1022
  %v1047 = vunpack.c.h.b16 %v1022
  %v1048 = vunpack.c.l.b16 %v1023
  %v1049 = vunpack.c.h.b16 %v1023
  %v1050 = vunpack.c.l.b16 %v1024
  %v1051 = vunpack.c.h.b16 %v1024
  %v1052 = vunpack.c.l.b16 %v1025
  %v1053 = vunpack.c.h.b16 %v1025
  %v1054 = vpack.c.b16 %v1040, %v1038
  %v1055 = vpack.c.b16 %v1041, %v1039
  %v1056 = vpack.c.b16 %v1044, %v1042
  %v1057 = vpack.c.b16 %v1045, %v1043
  %v1058 = vpack.c.b16 %v1048, %v1046
  %v1059 = vpack.c.b16 %v1049, %v1047
  %v1060 = vpack.c.b16 %v1052, %v1050
  %v1061 = vpack.c.b16 %v1053, %v1051
  %v1071 = vsel %vm502, %v1029, 0
  %1073 = vmatprep.subr.bf16.mxu0 %v1055
  %1074 = vmatpush1.bf16.msra.mxu0 %v1054
  %1075 = vmatprep.subr.bf16.mxu0 %v1057
  %1076 = vmatpush1.bf16.msra.mxu0 %v1056
  %1077 = vmatprep.subr.bf16.mxu0 %v1059
  %1078 = vmatpush1.bf16.msra.mxu0 %v1058
  %1079 = vmatprep.subr.bf16.mxu0 %v1061
  %1080 = vmatpush1.bf16.msra.mxu0 %v1060
  %1081 = vmatprep.subr.bf16.mxu0 0
  %1082 = vmatpush1.bf16.msra.mxu0 0
  %1083 = vmatprep.subr.bf16.mxu0 0
  %1084 = vmatpush1.bf16.msra.mxu0 0
  %1085 = vmatprep.subr.bf16.mxu0 0
  %1086 = vmatpush1.bf16.msra.mxu0 0
  %1087 = vmatprep.subr.bf16.mxu0 0
  %1088 = vmatpush1.bf16.msra.mxu0 0
  %1089 = vmatprep.subr.bf16.mxu0 0
  %1090 = vmatpush1.bf16.msra.mxu0 0
  %1091 = vmatprep.subr.bf16.mxu0 0
  %1092 = vmatpush1.bf16.msra.mxu0 0
  %1093 = vmatprep.subr.bf16.mxu0 0
  %1094 = vmatpush1.bf16.msra.mxu0 0
  %1095 = vmatprep.subr.bf16.mxu0 0
  %1096 = vmatpush1.bf16.msra.mxu0 0
  %1097 = vmatprep.subr.bf16.mxu0 0
  %1098 = vmatpush1.bf16.msra.mxu0 0
  %1099 = vmatprep.subr.bf16.mxu0 0
  %1100 = vmatpush1.bf16.msra.mxu0 0
  %1101 = vmatprep.subr.bf16.mxu0 0
  %1102 = vmatpush1.bf16.msra.mxu0 0
  %1103 = vmatprep.subr.bf16.mxu0 0
  %1104 = vmatpush1.bf16.msra.mxu0 0
  %1105 = vmatprep.mubr.bf16.mxu0 0
  %1106 = vmatmul.mubr.bf16.gmra.mrb[0].mxu0 %v1071
  %v1107 = vpop.f32.mrb[0].mxu0
  %v1108 = vadd.f32 %v1026, %v1107
  %v1109 = vpop.f32.mrb[0].mxu0
  %v1110 = vadd.f32 %v1027, %v1109
  %v1111 = vpop.f32.mrb[0].mxu0
  %v1112 = vpop.f32.mrb[0].mxu0
  %1113 = vdwg.mxu0
  %v1114 = vxor.u32 %v1108, 2147483648
  %v1115 = vxor.u32 %v1110, 2147483648
  %v1116 = vmul.f32 %v1114, 1.442695
  %v1117 = vpow.pop %v1116
  %v1118 = vmul.f32 %v1115, 1.442695
  %v1119 = vpow.pop %v1118
  %v1120 = vadd.f32 %v1117, 1.0
  %v1121 = vadd.f32 %v1119, 1.0
  %v1122 = vrcp.pop %v1120
  %v1123 = vmul.f32 1.0, %v1122
  %v1124 = vrcp.pop %v1121
  %v1125 = vmul.f32 1.0, %v1124
  %v1126 = vtanh.pop %v1110
  %v1127 = vmul.f32 %v1123, %v944
  %v1128 = vmul.f32 %v1123, %v1126
  %1130 = vrot.lane.b32.xlu0 %v1128, 64
  %v1131 = vpop.permute.xlu0 %1130
  %v1133 = vadd.f32 %v1127, %v1131
  %v1134 = vtanh.pop %v1133
  %v1135 = vmul.f32 %v1125, %v1134
  %v1136 = vpack.c.bf16 %v1135, %v1135
  %v1137 = vld [vmem:[%s9] sm:$0xf]
  %v1138 = vld [vmem:[%s9 + $0x4] sm:$0xf]
  %v1139 = vld [vmem:[%s9 + $0x8] sm:$0xf]
  %v1140 = vld [vmem:[%s9 + $0xc] sm:$0xf]
  %v1141 = vld [vmem:[%s10] sm:$0x1]
  %v1143 = vlaneseq
  %v1144 = vshrl.u32 %v1143, 7
  %v1145 = vsub.s32 0, %v1144
  %v1146 = vrot.slane %v1141, %v1145
  %1149 = vrot.lane.b32.xlu0 %v1136, 32
  %v1150 = vpop.permute.xlu0 %1149
  %v1155 = vunpack.c.l.b16 %v1137
  %v1156 = vunpack.c.l.b16 %v1138
  %v1157 = vunpack.c.l.b16 %v1139
  %v1158 = vunpack.c.l.b16 %v1140
  %v1159 = vpack.c.b16 %v1156, %v1155
  %v1160 = vpack.c.b16 %v1158, %v1157
  %v1164 = vsel %vm215, %v1150, 0
  %1166 = vmatprep.subr.bf16.mxu0 0
  %1167 = vmatpush1.bf16.msra.mxu0 %v1159
  %1168 = vmatprep.subr.bf16.mxu0 0
  %1169 = vmatpush1.bf16.msra.mxu0 %v1160
  %1170 = vmatprep.subr.bf16.mxu0 0
  %1171 = vmatpush1.bf16.msra.mxu0 0
  %1172 = vmatprep.subr.bf16.mxu0 0
  %1173 = vmatpush1.bf16.msra.mxu0 0
  %1174 = vmatprep.subr.bf16.mxu0 0
  %1175 = vmatpush1.bf16.msra.mxu0 0
  %1176 = vmatprep.subr.bf16.mxu0 0
  %1177 = vmatpush1.bf16.msra.mxu0 0
  %1178 = vmatprep.subr.bf16.mxu0 0
  %1179 = vmatpush1.bf16.msra.mxu0 0
  %1180 = vmatprep.subr.bf16.mxu0 0
  %1181 = vmatpush1.bf16.msra.mxu0 0
  %1182 = vmatprep.subr.bf16.mxu0 0
  %1183 = vmatpush1.bf16.msra.mxu0 0
  %1184 = vmatprep.subr.bf16.mxu0 0
  %1185 = vmatpush1.bf16.msra.mxu0 0
  %1186 = vmatprep.subr.bf16.mxu0 0
  %1187 = vmatpush1.bf16.msra.mxu0 0
  %1188 = vmatprep.subr.bf16.mxu0 0
  %1189 = vmatpush1.bf16.msra.mxu0 0
  %1190 = vmatprep.subr.bf16.mxu0 0
  %1191 = vmatpush1.bf16.msra.mxu0 0
  %1192 = vmatprep.subr.bf16.mxu0 0
  %1193 = vmatpush1.bf16.msra.mxu0 0
  %1194 = vmatprep.subr.bf16.mxu0 0
  %1195 = vmatpush1.bf16.msra.mxu0 0
  %1196 = vmatprep.subr.bf16.mxu0 0
  %1197 = vmatpush1.bf16.msra.mxu0 0
  %1198 = vmatprep.mubr.bf16.mxu0 0
  %1199 = vmatmul.mubr.bf16.gmra.mrb[0].mxu0 %v1164
  %v1200 = vpop.f32.mrb[0].mxu0
  %v1201 = vadd.f32 %v1146, %v1200
  %v1202 = vpop.f32.mrb[0].mxu0
  %v1203 = vpop.f32.mrb[0].mxu0
  %v1204 = vpop.f32.mrb[0].mxu0
  %1205 = vdwg.mxu0
  %1206 = vst [vmem:[%s11 + $0x18] sm:$0xff] %v1201
  %v1207 = vld [vmem:[%s8] sm:$0xff]
  %v1208 = vld [vmem:[%s8 + $0x8] sm:$0xff]
  %v1209 = vld [vmem:[%s8 + $0x10] sm:$0xff]
  %v1210 = vld [vmem:[%s8 + $0x18] sm:$0xff]
  %v1211 = vld [vmem:[%s8 + $0x20] sm:$0xff]
  %v1212 = vld [vmem:[%s8 + $0x28] sm:$0xff]
  %v1213 = vld [vmem:[%s8 + $0x30] sm:$0xff]
  %v1214 = vld [vmem:[%s8 + $0x38] sm:$0xff]
  %v1215 = vld [vmem:[#allocation2 + $0x50] sm:$0xff]
  %v1216 = vld [vmem:[#allocation2 + $0x58] sm:$0xff]
  %1217 = vrot.lane.b32.xlu0 %v1136, 64
  %v1218 = vpop.permute.xlu0 %1217
  %v1227 = vunpack.c.l.b16 %v1207
  %v1228 = vunpack.c.h.b16 %v1207
  %v1229 = vunpack.c.l.b16 %v1208
  %v1230 = vunpack.c.h.b16 %v1208
  %v1231 = vunpack.c.l.b16 %v1209
  %v1232 = vunpack.c.h.b16 %v1209
  %v1233 = vunpack.c.l.b16 %v1210
  %v1234 = vunpack.c.h.b16 %v1210
  %v1235 = vunpack.c.l.b16 %v1211
  %v1236 = vunpack.c.h.b16 %v1211
  %v1237 = vunpack.c.l.b16 %v1212
  %v1238 = vunpack.c.h.b16 %v1212
  %v1239 = vunpack.c.l.b16 %v1213
  %v1240 = vunpack.c.h.b16 %v1213
  %v1241 = vunpack.c.l.b16 %v1214
  %v1242 = vunpack.c.h.b16 %v1214
  %v1243 = vpack.c.b16 %v1229, %v1227
  %v1244 = vpack.c.b16 %v1230, %v1228
  %v1245 = vpack.c.b16 %v1233, %v1231
  %v1246 = vpack.c.b16 %v1234, %v1232
  %v1247 = vpack.c.b16 %v1237, %v1235
  %v1248 = vpack.c.b16 %v1238, %v1236
  %v1249 = vpack.c.b16 %v1241, %v1239
  %v1250 = vpack.c.b16 %v1242, %v1240
  %v1260 = vsel %vm502, %v1218, 0
  %1262 = vmatprep.subr.bf16.mxu0 %v1244
  %1263 = vmatpush1.bf16.msra.mxu0 %v1243
  %1264 = vmatprep.subr.bf16.mxu0 %v1246
  %1265 = vmatpush1.bf16.msra.mxu0 %v1245
  %1266 = vmatprep.subr.bf16.mxu0 %v1248
  %1267 = vmatpush1.bf16.msra.mxu0 %v1247
  %1268 = vmatprep.subr.bf16.mxu0 %v1250
  %1269 = vmatpush1.bf16.msra.mxu0 %v1249
  %1270 = vmatprep.subr.bf16.mxu0 0
  %1271 = vmatpush1.bf16.msra.mxu0 0
  %1272 = vmatprep.subr.bf16.mxu0 0
  %1273 = vmatpush1.bf16.msra.mxu0 0
  %1274 = vmatprep.subr.bf16.mxu0 0
  %1275 = vmatpush1.bf16.msra.mxu0 0
  %1276 = vmatprep.subr.bf16.mxu0 0
  %1277 = vmatpush1.bf16.msra.mxu0 0
  %1278 = vmatprep.subr.bf16.mxu0 0
  %1279 = vmatpush1.bf16.msra.mxu0 0
  %1280 = vmatprep.subr.bf16.mxu0 0
  %1281 = vmatpush1.bf16.msra.mxu0 0
  %1282 = vmatprep.subr.bf16.mxu0 0
  %1283 = vmatpush1.bf16.msra.mxu0 0
  %1284 = vmatprep.subr.bf16.mxu0 0
  %1285 = vmatpush1.bf16.msra.mxu0 0
  %1286 = vmatprep.subr.bf16.mxu0 0
  %1287 = vmatpush1.bf16.msra.mxu0 0
  %1288 = vmatprep.subr.bf16.mxu0 0
  %1289 = vmatpush1.bf16.msra.mxu0 0
  %1290 = vmatprep.subr.bf16.mxu0 0
  %1291 = vmatpush1.bf16.msra.mxu0 0
  %1292 = vmatprep.subr.bf16.mxu0 0
  %1293 = vmatpush1.bf16.msra.mxu0 0
  %1294 = vmatprep.mubr.bf16.mxu0 0
  %1295 = vmatmul.mubr.bf16.gmra.mrb[0].mxu0 %v1260
  %v1296 = vpop.f32.mrb[0].mxu0
  %v1297 = vadd.f32 %v1215, %v1296
  %v1298 = vpop.f32.mrb[0].mxu0
  %v1299 = vadd.f32 %v1216, %v1298
  %v1300 = vpop.f32.mrb[0].mxu0
  %v1301 = vpop.f32.mrb[0].mxu0
  %1302 = vdwg.mxu0
  %v1303 = vxor.u32 %v1297, 2147483648
  %v1304 = vxor.u32 %v1299, 2147483648
  %v1305 = vmul.f32 %v1303, 1.442695
  %v1306 = vpow.pop %v1305
  %v1307 = vmul.f32 %v1304, 1.442695
  %v1308 = vpow.pop %v1307
  %v1309 = vadd.f32 %v1306, 1.0
  %v1310 = vadd.f32 %v1308, 1.0
  %v1311 = vrcp.pop %v1309
  %v1312 = vmul.f32 1.0, %v1311
  %v1313 = vrcp.pop %v1310
  %v1314 = vmul.f32 1.0, %v1313
  %v1315 = vtanh.pop %v1299
  %v1316 = vmul.f32 %v1312, %v1133
  %v1317 = vmul.f32 %v1312, %v1315
  %1319 = vrot.lane.b32.xlu0 %v1317, 64
  %v1320 = vpop.permute.xlu0 %1319
  %v1322 = vadd.f32 %v1316, %v1320
  %v1323 = vtanh.pop %v1322
  %v1324 = vmul.f32 %v1314, %v1323
  %v1325 = vpack.c.bf16 %v1324, %v1324
  %v1326 = vld [vmem:[%s9] sm:$0xf]
  %v1327 = vld [vmem:[%s9 + $0x4] sm:$0xf]
  %v1328 = vld [vmem:[%s9 + $0x8] sm:$0xf]
  %v1329 = vld [vmem:[%s9 + $0xc] sm:$0xf]
  %v1330 = vld [vmem:[%s10] sm:$0x1]
  %v1332 = vlaneseq
  %v1333 = vshrl.u32 %v1332, 7
  %v1334 = vsub.s32 0, %v1333
  %v1335 = vrot.slane %v1330, %v1334
  %1338 = vrot.lane.b32.xlu0 %v1325, 32
  %v1339 = vpop.permute.xlu0 %1338
  %v1344 = vunpack.c.l.b16 %v1326
  %v1345 = vunpack.c.l.b16 %v1327
  %v1346 = vunpack.c.l.b16 %v1328
  %v1347 = vunpack.c.l.b16 %v1329
  %v1348 = vpack.c.b16 %v1345, %v1344
  %v1349 = vpack.c.b16 %v1347, %v1346
  %v1353 = vsel %vm215, %v1339, 0
  %1355 = vmatprep.subr.bf16.mxu0 0
  %1356 = vmatpush1.bf16.msra.mxu0 %v1348
  %1357 = vmatprep.subr.bf16.mxu0 0
  %1358 = vmatpush1.bf16.msra.mxu0 %v1349
  %1359 = vmatprep.subr.bf16.mxu0 0
  %1360 = vmatpush1.bf16.msra.mxu0 0
  %1361 = vmatprep.subr.bf16.mxu0 0
  %1362 = vmatpush1.bf16.msra.mxu0 0
  %1363 = vmatprep.subr.bf16.mxu0 0
  %1364 = vmatpush1.bf16.msra.mxu0 0
  %1365 = vmatprep.subr.bf16.mxu0 0
  %1366 = vmatpush1.bf16.msra.mxu0 0
  %1367 = vmatprep.subr.bf16.mxu0 0
  %1368 = vmatpush1.bf16.msra.mxu0 0
  %1369 = vmatprep.subr.bf16.mxu0 0
  %1370 = vmatpush1.bf16.msra.mxu0 0
  %1371 = vmatprep.subr.bf16.mxu0 0
  %1372 = vmatpush1.bf16.msra.mxu0 0
  %1373 = vmatprep.subr.bf16.mxu0 0
  %1374 = vmatpush1.bf16.msra.mxu0 0
  %1375 = vmatprep.subr.bf16.mxu0 0
  %1376 = vmatpush1.bf16.msra.mxu0 0
  %1377 = vmatprep.subr.bf16.mxu0 0
  %1378 = vmatpush1.bf16.msra.mxu0 0
  %1379 = vmatprep.subr.bf16.mxu0 0
  %1380 = vmatpush1.bf16.msra.mxu0 0
  %1381 = vmatprep.subr.bf16.mxu0 0
  %1382 = vmatpush1.bf16.msra.mxu0 0
  %1383 = vmatprep.subr.bf16.mxu0 0
  %1384 = vmatpush1.bf16.msra.mxu0 0
  %1385 = vmatprep.subr.bf16.mxu0 0
  %1386 = vmatpush1.bf16.msra.mxu0 0
  %1387 = vmatprep.mubr.bf16.mxu0 0
  %1388 = vmatmul.mubr.bf16.gmra.mrb[0].mxu0 %v1353
  %v1389 = vpop.f32.mrb[0].mxu0
  %v1390 = vadd.f32 %v1335, %v1389
  %v1391 = vpop.f32.mrb[0].mxu0
  %v1392 = vpop.f32.mrb[0].mxu0
  %v1393 = vpop.f32.mrb[0].mxu0
  %1394 = vdwg.mxu0
  %1395 = vst [vmem:[%s11 + $0x20] sm:$0xff] %v1390
  %v1396 = vld [vmem:[%s8] sm:$0xff]
  %v1397 = vld [vmem:[%s8 + $0x8] sm:$0xff]
  %v1398 = vld [vmem:[%s8 + $0x10] sm:$0xff]
  %v1399 = vld [vmem:[%s8 + $0x18] sm:$0xff]
  %v1400 = vld [vmem:[%s8 + $0x20] sm:$0xff]
  %v1401 = vld [vmem:[%s8 + $0x28] sm:$0xff]
  %v1402 = vld [vmem:[%s8 + $0x30] sm:$0xff]
  %v1403 = vld [vmem:[%s8 + $0x38] sm:$0xff]
  %v1404 = vld [vmem:[#allocation2 + $0x60] sm:$0xff]
  %v1405 = vld [vmem:[#allocation2 + $0x68] sm:$0xff]
  %1406 = vrot.lane.b32.xlu0 %v1325, 64
  %v1407 = vpop.permute.xlu0 %1406
  %v1416 = vunpack.c.l.b16 %v1396
  %v1417 = vunpack.c.h.b16 %v1396
  %v1418 = vunpack.c.l.b16 %v1397
  %v1419 = vunpack.c.h.b16 %v1397
  %v1420 = vunpack.c.l.b16 %v1398
  %v1421 = vunpack.c.h.b16 %v1398
  %v1422 = vunpack.c.l.b16 %v1399
  %v1423 = vunpack.c.h.b16 %v1399
  %v1424 = vunpack.c.l.b16 %v1400
  %v1425 = vunpack.c.h.b16 %v1400
  %v1426 = vunpack.c.l.b16 %v1401
  %v1427 = vunpack.c.h.b16 %v1401
  %v1428 = vunpack.c.l.b16 %v1402
  %v1429 = vunpack.c.h.b16 %v1402
  %v1430 = vunpack.c.l.b16 %v1403
  %v1431 = vunpack.c.h.b16 %v1403
  %v1432 = vpack.c.b16 %v1418, %v1416
  %v1433 = vpack.c.b16 %v1419, %v1417
  %v1434 = vpack.c.b16 %v1422, %v1420
  %v1435 = vpack.c.b16 %v1423, %v1421
  %v1436 = vpack.c.b16 %v1426, %v1424
  %v1437 = vpack.c.b16 %v1427, %v1425
  %v1438 = vpack.c.b16 %v1430, %v1428
  %v1439 = vpack.c.b16 %v1431, %v1429
  %v1449 = vsel %vm502, %v1407, 0
  %1451 = vmatprep.subr.bf16.mxu0 %v1433
  %1452 = vmatpush1.bf16.msra.mxu0 %v1432
  %1453 = vmatprep.subr.bf16.mxu0 %v1435
  %1454 = vmatpush1.bf16.msra.mxu0 %v1434
  %1455 = vmatprep.subr.bf16.mxu0 %v1437
  %1456 = vmatpush1.bf16.msra.mxu0 %v1436
  %1457 = vmatprep.subr.bf16.mxu0 %v1439
  %1458 = vmatpush1.bf16.msra.mxu0 %v1438
  %1459 = vmatprep.subr.bf16.mxu0 0
  %1460 = vmatpush1.bf16.msra.mxu0 0
  %1461 = vmatprep.subr.bf16.mxu0 0
  %1462 = vmatpush1.bf16.msra.mxu0 0
  %1463 = vmatprep.subr.bf16.mxu0 0
  %1464 = vmatpush1.bf16.msra.mxu0 0
  %1465 = vmatprep.subr.bf16.mxu0 0
  %1466 = vmatpush1.bf16.msra.mxu0 0
  %1467 = vmatprep.subr.bf16.mxu0 0
  %1468 = vmatpush1.bf16.msra.mxu0 0
  %1469 = vmatprep.subr.bf16.mxu0 0
  %1470 = vmatpush1.bf16.msra.mxu0 0
  %1471 = vmatprep.subr.bf16.mxu0 0
  %1472 = vmatpush1.bf16.msra.mxu0 0
  %1473 = vmatprep.subr.bf16.mxu0 0
  %1474 = vmatpush1.bf16.msra.mxu0 0
  %1475 = vmatprep.subr.bf16.mxu0 0
  %1476 = vmatpush1.bf16.msra.mxu0 0
  %1477 = vmatprep.subr.bf16.mxu0 0
  %1478 = vmatpush1.bf16.msra.mxu0 0
  %1479 = vmatprep.subr.bf16.mxu0 0
  %1480 = vmatpush1.bf16.msra.mxu0 0
  %1481 = vmatprep.subr.bf16.mxu0 0
  %1482 = vmatpush1.bf16.msra.mxu0 0
  %1483 = vmatprep.mubr.bf16.mxu0 0
  %1484 = vmatmul.mubr.bf16.gmra.mrb[0].mxu0 %v1449
  %v1485 = vpop.f32.mrb[0].mxu0
  %v1486 = vadd.f32 %v1404, %v1485
  %v1487 = vpop.f32.mrb[0].mxu0
  %v1488 = vadd.f32 %v1405, %v1487
  %v1489 = vpop.f32.mrb[0].mxu0
  %v1490 = vpop.f32.mrb[0].mxu0
  %1491 = vdwg.mxu0
  %v1492 = vxor.u32 %v1486, 2147483648
  %v1493 = vxor.u32 %v1488, 2147483648
  %v1494 = vmul.f32 %v1492, 1.442695
  %v1495 = vpow.pop %v1494
  %v1496 = vmul.f32 %v1493, 1.442695
  %v1497 = vpow.pop %v1496
  %v1498 = vadd.f32 %v1495, 1.0
  %v1499 = vadd.f32 %v1497, 1.0
  %v1500 = vrcp.pop %v1498
  %v1501 = vmul.f32 1.0, %v1500
  %v1502 = vrcp.pop %v1499
  %v1503 = vmul.f32 1.0, %v1502
  %v1504 = vtanh.pop %v1488
  %v1505 = vmul.f32 %v1501, %v1322
  %v1506 = vmul.f32 %v1501, %v1504
  %1508 = vrot.lane.b32.xlu0 %v1506, 64
  %v1509 = vpop.permute.xlu0 %1508
  %v1511 = vadd.f32 %v1505, %v1509
  %v1512 = vtanh.pop %v1511
  %v1513 = vmul.f32 %v1503, %v1512
  %v1514 = vpack.c.bf16 %v1513, %v1513
  %v1515 = vld [vmem:[%s9] sm:$0xf]
  %v1516 = vld [vmem:[%s9 + $0x4] sm:$0xf]
  %v1517 = vld [vmem:[%s9 + $0x8] sm:$0xf]
  %v1518 = vld [vmem:[%s9 + $0xc] sm:$0xf]
  %v1519 = vld [vmem:[%s10] sm:$0x1]
  %v1521 = vlaneseq
  %v1522 = vshrl.u32 %v1521, 7
  %v1523 = vsub.s32 0, %v1522
  %v1524 = vrot.slane %v1519, %v1523
  %1527 = vrot.lane.b32.xlu0 %v1514, 32
  %v1528 = vpop.permute.xlu0 %1527
  %v1533 = vunpack.c.l.b16 %v1515
  %v1534 = vunpack.c.l.b16 %v1516
  %v1535 = vunpack.c.l.b16 %v1517
  %v1536 = vunpack.c.l.b16 %v1518
  %v1537 = vpack.c.b16 %v1534, %v1533
  %v1538 = vpack.c.b16 %v1536, %v1535
  %v1542 = vsel %vm215, %v1528, 0
  %1544 = vmatprep.subr.bf16.mxu0 0
  %1545 = vmatpush1.bf16.msra.mxu0 %v1537
  %1546 = vmatprep.subr.bf16.mxu0 0
  %1547 = vmatpush1.bf16.msra.mxu0 %v1538
  %1548 = vmatprep.subr.bf16.mxu0 0
  %1549 = vmatpush1.bf16.msra.mxu0 0
  %1550 = vmatprep.subr.bf16.mxu0 0
  %1551 = vmatpush1.bf16.msra.mxu0 0
  %1552 = vmatprep.subr.bf16.mxu0 0
  %1553 = vmatpush1.bf16.msra.mxu0 0
  %1554 = vmatprep.subr.bf16.mxu0 0
  %1555 = vmatpush1.bf16.msra.mxu0 0
  %1556 = vmatprep.subr.bf16.mxu0 0
  %1557 = vmatpush1.bf16.msra.mxu0 0
  %1558 = vmatprep.subr.bf16.mxu0 0
  %1559 = vmatpush1.bf16.msra.mxu0 0
  %1560 = vmatprep.subr.bf16.mxu0 0
  %1561 = vmatpush1.bf16.msra.mxu0 0
  %1562 = vmatprep.subr.bf16.mxu0 0
  %1563 = vmatpush1.bf16.msra.mxu0 0
  %1564 = vmatprep.subr.bf16.mxu0 0
  %1565 = vmatpush1.bf16.msra.mxu0 0
  %1566 = vmatprep.subr.bf16.mxu0 0
  %1567 = vmatpush1.bf16.msra.mxu0 0
  %1568 = vmatprep.subr.bf16.mxu0 0
  %1569 = vmatpush1.bf16.msra.mxu0 0
  %1570 = vmatprep.subr.bf16.mxu0 0
  %1571 = vmatpush1.bf16.msra.mxu0 0
  %1572 = vmatprep.subr.bf16.mxu0 0
  %1573 = vmatpush1.bf16.msra.mxu0 0
  %1574 = vmatprep.subr.bf16.mxu0 0
  %1575 = vmatpush1.bf16.msra.mxu0 0
  %1576 = vmatprep.mubr.bf16.mxu0 0
  %1577 = vmatmul.mubr.bf16.gmra.mrb[0].mxu0 %v1542
  %v1578 = vpop.f32.mrb[0].mxu0
  %v1579 = vadd.f32 %v1524, %v1578
  %v1580 = vpop.f32.mrb[0].mxu0
  %v1581 = vpop.f32.mrb[0].mxu0
  %v1582 = vpop.f32.mrb[0].mxu0
  %1583 = vdwg.mxu0
  %1584 = vst [vmem:[%s11 + $0x28] sm:$0xff] %v1579
  %v1585 = vld [vmem:[%s8] sm:$0xff]
  %v1586 = vld [vmem:[%s8 + $0x8] sm:$0xff]
  %v1587 = vld [vmem:[%s8 + $0x10] sm:$0xff]
  %v1588 = vld [vmem:[%s8 + $0x18] sm:$0xff]
  %v1589 = vld [vmem:[%s8 + $0x20] sm:$0xff]
  %v1590 = vld [vmem:[%s8 + $0x28] sm:$0xff]
  %v1591 = vld [vmem:[%s8 + $0x30] sm:$0xff]
  %v1592 = vld [vmem:[%s8 + $0x38] sm:$0xff]
  %v1593 = vld [vmem:[#allocation2 + $0x70] sm:$0xff]
  %v1594 = vld [vmem:[#allocation2 + $0x78] sm:$0xff]
  %1595 = vrot.lane.b32.xlu0 %v1514, 64
  %v1596 = vpop.permute.xlu0 %1595
  %v1605 = vunpack.c.l.b16 %v1585
  %v1606 = vunpack.c.h.b16 %v1585
  %v1607 = vunpack.c.l.b16 %v1586
  %v1608 = vunpack.c.h.b16 %v1586
  %v1609 = vunpack.c.l.b16 %v1587
  %v1610 = vunpack.c.h.b16 %v1587
  %v1611 = vunpack.c.l.b16 %v1588
  %v1612 = vunpack.c.h.b16 %v1588
  %v1613 = vunpack.c.l.b16 %v1589
  %v1614 = vunpack.c.h.b16 %v1589
  %v1615 = vunpack.c.l.b16 %v1590
  %v1616 = vunpack.c.h.b16 %v1590
  %v1617 = vunpack.c.l.b16 %v1591
  %v1618 = vunpack.c.h.b16 %v1591
  %v1619 = vunpack.c.l.b16 %v1592
  %v1620 = vunpack.c.h.b16 %v1592
  %v1621 = vpack.c.b16 %v1607, %v1605
  %v1622 = vpack.c.b16 %v1608, %v1606
  %v1623 = vpack.c.b16 %v1611, %v1609
  %v1624 = vpack.c.b16 %v1612, %v1610
  %v1625 = vpack.c.b16 %v1615, %v1613
  %v1626 = vpack.c.b16 %v1616, %v1614
  %v1627 = vpack.c.b16 %v1619, %v1617
  %v1628 = vpack.c.b16 %v1620, %v1618
  %v1638 = vsel %vm502, %v1596, 0
  %1640 = vmatprep.subr.bf16.mxu0 %v1622
  %1641 = vmatpush1.bf16.msra.mxu0 %v1621
  %1642 = vmatprep.subr.bf16.mxu0 %v1624
  %1643 = vmatpush1.bf16.msra.mxu0 %v1623
  %1644 = vmatprep.subr.bf16.mxu0 %v1626
  %1645 = vmatpush1.bf16.msra.mxu0 %v1625
  %1646 = vmatprep.subr.bf16.mxu0 %v1628
  %1647 = vmatpush1.bf16.msra.mxu0 %v1627
  %1648 = vmatprep.subr.bf16.mxu0 0
  %1649 = vmatpush1.bf16.msra.mxu0 0
  %1650 = vmatprep.subr.bf16.mxu0 0
  %1651 = vmatpush1.bf16.msra.mxu0 0
  %1652 = vmatprep.subr.bf16.mxu0 0
  %1653 = vmatpush1.bf16.msra.mxu0 0
  %1654 = vmatprep.subr.bf16.mxu0 0
  %1655 = vmatpush1.bf16.msra.mxu0 0
  %1656 = vmatprep.subr.bf16.mxu0 0
  %1657 = vmatpush1.bf16.msra.mxu0 0
  %1658 = vmatprep.subr.bf16.mxu0 0
  %1659 = vmatpush1.bf16.msra.mxu0 0
  %1660 = vmatprep.subr.bf16.mxu0 0
  %1661 = vmatpush1.bf16.msra.mxu0 0
  %1662 = vmatprep.subr.bf16.mxu0 0
  %1663 = vmatpush1.bf16.msra.mxu0 0
  %1664 = vmatprep.subr.bf16.mxu0 0
  %1665 = vmatpush1.bf16.msra.mxu0 0
  %1666 = vmatprep.subr.bf16.mxu0 0
  %1667 = vmatpush1.bf16.msra.mxu0 0
  %1668 = vmatprep.subr.bf16.mxu0 0
  %1669 = vmatpush1.bf16.msra.mxu0 0
  %1670 = vmatprep.subr.bf16.mxu0 0
  %1671 = vmatpush1.bf16.msra.mxu0 0
  %1672 = vmatprep.mubr.bf16.mxu0 0
  %1673 = vmatmul.mubr.bf16.gmra.mrb[0].mxu0 %v1638
  %v1674 = vpop.f32.mrb[0].mxu0
  %v1675 = vadd.f32 %v1593, %v1674
  %v1676 = vpop.f32.mrb[0].mxu0
  %v1677 = vadd.f32 %v1594, %v1676
  %v1678 = vpop.f32.mrb[0].mxu0
  %v1679 = vpop.f32.mrb[0].mxu0
  %1680 = vdwg.mxu0
  %v1681 = vxor.u32 %v1675, 2147483648
  %v1682 = vxor.u32 %v1677, 2147483648
  %v1683 = vmul.f32 %v1681, 1.442695
  %v1684 = vpow.pop %v1683
  %v1685 = vmul.f32 %v1682, 1.442695
  %v1686 = vpow.pop %v1685
  %v1687 = vadd.f32 %v1684, 1.0
  %v1688 = vadd.f32 %v1686, 1.0
  %v1689 = vrcp.pop %v1687
  %v1690 = vmul.f32 1.0, %v1689
  %v1691 = vrcp.pop %v1688
  %v1692 = vmul.f32 1.0, %v1691
  %v1693 = vtanh.pop %v1677
  %v1694 = vmul.f32 %v1690, %v1511
  %v1695 = vmul.f32 %v1690, %v1693
  %1697 = vrot.lane.b32.xlu0 %v1695, 64
  %v1698 = vpop.permute.xlu0 %1697
  %v1700 = vadd.f32 %v1694, %v1698
  %v1701 = vtanh.pop %v1700
  %v1702 = vmul.f32 %v1692, %v1701
  %v1703 = vpack.c.bf16 %v1702, %v1702
  %v1704 = vld [vmem:[%s9] sm:$0xf]
  %v1705 = vld [vmem:[%s9 + $0x4] sm:$0xf]
  %v1706 = vld [vmem:[%s9 + $0x8] sm:$0xf]
  %v1707 = vld [vmem:[%s9 + $0xc] sm:$0xf]
  %v1708 = vld [vmem:[%s10] sm:$0x1]
  %v1710 = vlaneseq
  %v1711 = vshrl.u32 %v1710, 7
  %v1712 = vsub.s32 0, %v1711
  %v1713 = vrot.slane %v1708, %v1712
  %1716 = vrot.lane.b32.xlu0 %v1703, 32
  %v1717 = vpop.permute.xlu0 %1716
  %v1722 = vunpack.c.l.b16 %v1704
  %v1723 = vunpack.c.l.b16 %v1705
  %v1724 = vunpack.c.l.b16 %v1706
  %v1725 = vunpack.c.l.b16 %v1707
  %v1726 = vpack.c.b16 %v1723, %v1722
  %v1727 = vpack.c.b16 %v1725, %v1724
  %v1731 = vsel %vm215, %v1717, 0
  %1733 = vmatprep.subr.bf16.mxu0 0
  %1734 = vmatpush1.bf16.msra.mxu0 %v1726
  %1735 = vmatprep.subr.bf16.mxu0 0
  %1736 = vmatpush1.bf16.msra.mxu0 %v1727
  %1737 = vmatprep.subr.bf16.mxu0 0
  %1738 = vmatpush1.bf16.msra.mxu0 0
  %1739 = vmatprep.subr.bf16.mxu0 0
  %1740 = vmatpush1.bf16.msra.mxu0 0
  %1741 = vmatprep.subr.bf16.mxu0 0
  %1742 = vmatpush1.bf16.msra.mxu0 0
  %1743 = vmatprep.subr.bf16.mxu0 0
  %1744 = vmatpush1.bf16.msra.mxu0 0
  %1745 = vmatprep.subr.bf16.mxu0 0
  %1746 = vmatpush1.bf16.msra.mxu0 0
  %1747 = vmatprep.subr.bf16.mxu0 0
  %1748 = vmatpush1.bf16.msra.mxu0 0
  %1749 = vmatprep.subr.bf16.mxu0 0
  %1750 = vmatpush1.bf16.msra.mxu0 0
  %1751 = vmatprep.subr.bf16.mxu0 0
  %1752 = vmatpush1.bf16.msra.mxu0 0
  %1753 = vmatprep.subr.bf16.mxu0 0
  %1754 = vmatpush1.bf16.msra.mxu0 0
  %1755 = vmatprep.subr.bf16.mxu0 0
  %1756 = vmatpush1.bf16.msra.mxu0 0
  %1757 = vmatprep.subr.bf16.mxu0 0
  %1758 = vmatpush1.bf16.msra.mxu0 0
  %1759 = vmatprep.subr.bf16.mxu0 0
  %1760 = vmatpush1.bf16.msra.mxu0 0
  %1761 = vmatprep.subr.bf16.mxu0 0
  %1762 = vmatpush1.bf16.msra.mxu0 0
  %1763 = vmatprep.subr.bf16.mxu0 0
  %1764 = vmatpush1.bf16.msra.mxu0 0
  %1765 = vmatprep.mubr.bf16.mxu0 0
  %1766 = vmatmul.mubr.bf16.gmra.mrb[0].mxu0 %v1731
  %v1767 = vpop.f32.mrb[0].mxu0
  %v1768 = vadd.f32 %v1713, %v1767
  %v1769 = vpop.f32.mrb[0].mxu0
  %v1770 = vpop.f32.mrb[0].mxu0
  %v1771 = vpop.f32.mrb[0].mxu0
  %1772 = vdwg.mxu0
  %1773 = vst [vmem:[%s11 + $0x30] sm:$0xff] %v1768
  %v1774 = vld [vmem:[%s8] sm:$0xff]
  %v1775 = vld [vmem:[%s8 + $0x8] sm:$0xff]
  %v1776 = vld [vmem:[%s8 + $0x10] sm:$0xff]
  %v1777 = vld [vmem:[%s8 + $0x18] sm:$0xff]
  %v1778 = vld [vmem:[%s8 + $0x20] sm:$0xff]
  %v1779 = vld [vmem:[%s8 + $0x28] sm:$0xff]
  %v1780 = vld [vmem:[%s8 + $0x30] sm:$0xff]
  %v1781 = vld [vmem:[%s8 + $0x38] sm:$0xff]
  %v1782 = vld [vmem:[#allocation2 + $0x80] sm:$0xff]
  %v1783 = vld [vmem:[#allocation2 + $0x88] sm:$0xff]
  %1784 = vrot.lane.b32.xlu0 %v1703, 64
  %v1785 = vpop.permute.xlu0 %1784
  %v1794 = vunpack.c.l.b16 %v1774
  %v1795 = vunpack.c.h.b16 %v1774
  %v1796 = vunpack.c.l.b16 %v1775
  %v1797 = vunpack.c.h.b16 %v1775
  %v1798 = vunpack.c.l.b16 %v1776
  %v1799 = vunpack.c.h.b16 %v1776
  %v1800 = vunpack.c.l.b16 %v1777
  %v1801 = vunpack.c.h.b16 %v1777
  %v1802 = vunpack.c.l.b16 %v1778
  %v1803 = vunpack.c.h.b16 %v1778
  %v1804 = vunpack.c.l.b16 %v1779
  %v1805 = vunpack.c.h.b16 %v1779
  %v1806 = vunpack.c.l.b16 %v1780
  %v1807 = vunpack.c.h.b16 %v1780
  %v1808 = vunpack.c.l.b16 %v1781
  %v1809 = vunpack.c.h.b16 %v1781
  %v1810 = vpack.c.b16 %v1796, %v1794
  %v1811 = vpack.c.b16 %v1797, %v1795
  %v1812 = vpack.c.b16 %v1800, %v1798
  %v1813 = vpack.c.b16 %v1801, %v1799
  %v1814 = vpack.c.b16 %v1804, %v1802
  %v1815 = vpack.c.b16 %v1805, %v1803
  %v1816 = vpack.c.b16 %v1808, %v1806
  %v1817 = vpack.c.b16 %v1809, %v1807
  %v1827 = vsel %vm502, %v1785, 0
  %1829 = vmatprep.subr.bf16.mxu0 %v1811
  %1830 = vmatpush1.bf16.msra.mxu0 %v1810
  %1831 = vmatprep.subr.bf16.mxu0 %v1813
  %1832 = vmatpush1.bf16.msra.mxu0 %v1812
  %1833 = vmatprep.subr.bf16.mxu0 %v1815
  %1834 = vmatpush1.bf16.msra.mxu0 %v1814
  %1835 = vmatprep.subr.bf16.mxu0 %v1817
  %1836 = vmatpush1.bf16.msra.mxu0 %v1816
  %1837 = vmatprep.subr.bf16.mxu0 0
  %1838 = vmatpush1.bf16.msra.mxu0 0
  %1839 = vmatprep.subr.bf16.mxu0 0
  %1840 = vmatpush1.bf16.msra.mxu0 0
  %1841 = vmatprep.subr.bf16.mxu0 0
  %1842 = vmatpush1.bf16.msra.mxu0 0
  %1843 = vmatprep.subr.bf16.mxu0 0
  %1844 = vmatpush1.bf16.msra.mxu0 0
  %1845 = vmatprep.subr.bf16.mxu0 0
  %1846 = vmatpush1.bf16.msra.mxu0 0
  %1847 = vmatprep.subr.bf16.mxu0 0
  %1848 = vmatpush1.bf16.msra.mxu0 0
  %1849 = vmatprep.subr.bf16.mxu0 0
  %1850 = vmatpush1.bf16.msra.mxu0 0
  %1851 = vmatprep.subr.bf16.mxu0 0
  %1852 = vmatpush1.bf16.msra.mxu0 0
  %1853 = vmatprep.subr.bf16.mxu0 0
  %1854 = vmatpush1.bf16.msra.mxu0 0
  %1855 = vmatprep.subr.bf16.mxu0 0
  %1856 = vmatpush1.bf16.msra.mxu0 0
  %1857 = vmatprep.subr.bf16.mxu0 0
  %1858 = vmatpush1.bf16.msra.mxu0 0
  %1859 = vmatprep.subr.bf16.mxu0 0
  %1860 = vmatpush1.bf16.msra.mxu0 0
  %1861 = vmatprep.mubr.bf16.mxu0 0
  %1862 = vmatmul.mubr.bf16.gmra.mrb[0].mxu0 %v1827
  %v1863 = vpop.f32.mrb[0].mxu0
  %v1864 = vadd.f32 %v1782, %v1863
  %v1865 = vpop.f32.mrb[0].mxu0
  %v1866 = vadd.f32 %v1783, %v1865
  %v1867 = vpop.f32.mrb[0].mxu0
  %v1868 = vpop.f32.mrb[0].mxu0
  %1869 = vdwg.mxu0
  %v1870 = vxor.u32 %v1864, 2147483648
  %v1871 = vxor.u32 %v1866, 2147483648
  %v1872 = vmul.f32 %v1870, 1.442695
  %v1873 = vpow.pop %v1872
  %v1874 = vmul.f32 %v1871, 1.442695
  %v1875 = vpow.pop %v1874
  %v1876 = vadd.f32 %v1873, 1.0
  %v1877 = vadd.f32 %v1875, 1.0
  %v1878 = vrcp.pop %v1876
  %v1879 = vmul.f32 1.0, %v1878
  %v1880 = vrcp.pop %v1877
  %v1881 = vmul.f32 1.0, %v1880
  %v1882 = vtanh.pop %v1866
  %v1883 = vmul.f32 %v1879, %v1700
  %v1884 = vmul.f32 %v1879, %v1882
  %1886 = vrot.lane.b32.xlu0 %v1884, 64
  %v1887 = vpop.permute.xlu0 %1886
  %v1889 = vadd.f32 %v1883, %v1887
  %v1890 = vtanh.pop %v1889
  %v1891 = vmul.f32 %v1881, %v1890
  %v1892 = vpack.c.bf16 %v1891, %v1891
  %v1893 = vld [vmem:[%s9] sm:$0xf]
  %v1894 = vld [vmem:[%s9 + $0x4] sm:$0xf]
  %v1895 = vld [vmem:[%s9 + $0x8] sm:$0xf]
  %v1896 = vld [vmem:[%s9 + $0xc] sm:$0xf]
  %v1897 = vld [vmem:[%s10] sm:$0x1]
  %v1899 = vlaneseq
  %v1900 = vshrl.u32 %v1899, 7
  %v1901 = vsub.s32 0, %v1900
  %v1902 = vrot.slane %v1897, %v1901
  %1905 = vrot.lane.b32.xlu0 %v1892, 32
  %v1906 = vpop.permute.xlu0 %1905
  %v1911 = vunpack.c.l.b16 %v1893
  %v1912 = vunpack.c.l.b16 %v1894
  %v1913 = vunpack.c.l.b16 %v1895
  %v1914 = vunpack.c.l.b16 %v1896
  %v1915 = vpack.c.b16 %v1912, %v1911
  %v1916 = vpack.c.b16 %v1914, %v1913
  %v1920 = vsel %vm215, %v1906, 0
  %1922 = vmatprep.subr.bf16.mxu0 0
  %1923 = vmatpush1.bf16.msra.mxu0 %v1915
  %1924 = vmatprep.subr.bf16.mxu0 0
  %1925 = vmatpush1.bf16.msra.mxu0 %v1916
  %1926 = vmatprep.subr.bf16.mxu0 0
  %1927 = vmatpush1.bf16.msra.mxu0 0
  %1928 = vmatprep.subr.bf16.mxu0 0
  %1929 = vmatpush1.bf16.msra.mxu0 0
  %1930 = vmatprep.subr.bf16.mxu0 0
  %1931 = vmatpush1.bf16.msra.mxu0 0
  %1932 = vmatprep.subr.bf16.mxu0 0
  %1933 = vmatpush1.bf16.msra.mxu0 0
  %1934 = vmatprep.subr.bf16.mxu0 0
  %1935 = vmatpush1.bf16.msra.mxu0 0
  %1936 = vmatprep.subr.bf16.mxu0 0
  %1937 = vmatpush1.bf16.msra.mxu0 0
  %1938 = vmatprep.subr.bf16.mxu0 0
  %1939 = vmatpush1.bf16.msra.mxu0 0
  %1940 = vmatprep.subr.bf16.mxu0 0
  %1941 = vmatpush1.bf16.msra.mxu0 0
  %1942 = vmatprep.subr.bf16.mxu0 0
  %1943 = vmatpush1.bf16.msra.mxu0 0
  %1944 = vmatprep.subr.bf16.mxu0 0
  %1945 = vmatpush1.bf16.msra.mxu0 0
  %1946 = vmatprep.subr.bf16.mxu0 0
  %1947 = vmatpush1.bf16.msra.mxu0 0
  %1948 = vmatprep.subr.bf16.mxu0 0
  %1949 = vmatpush1.bf16.msra.mxu0 0
  %1950 = vmatprep.subr.bf16.mxu0 0
  %1951 = vmatpush1.bf16.msra.mxu0 0
  %1952 = vmatprep.subr.bf16.mxu0 0
  %1953 = vmatpush1.bf16.msra.mxu0 0
  %1954 = vmatprep.mubr.bf16.mxu0 0
  %1955 = vmatmul.mubr.bf16.gmra.mrb[0].mxu0 %v1920
  %v1956 = vpop.f32.mrb[0].mxu0
  %v1957 = vadd.f32 %v1902, %v1956
  %v1958 = vpop.f32.mrb[0].mxu0
  %v1959 = vpop.f32.mrb[0].mxu0
  %v1960 = vpop.f32.mrb[0].mxu0
  %1961 = vdwg.mxu0
  %1962 = vst [vmem:[%s11 + $0x38] sm:$0xff] %v1957
  %v1963 = vld [vmem:[%s8] sm:$0xff]
  %v1964 = vld [vmem:[%s8 + $0x8] sm:$0xff]
  %v1965 = vld [vmem:[%s8 + $0x10] sm:$0xff]
  %v1966 = vld [vmem:[%s8 + $0x18] sm:$0xff]
  %v1967 = vld [vmem:[%s8 + $0x20] sm:$0xff]
  %v1968 = vld [vmem:[%s8 + $0x28] sm:$0xff]
  %v1969 = vld [vmem:[%s8 + $0x30] sm:$0xff]
  %v1970 = vld [vmem:[%s8 + $0x38] sm:$0xff]
  %v1971 = vld [vmem:[#allocation2 + $0x90] sm:$0xff]
  %v1972 = vld [vmem:[#allocation2 + $0x98] sm:$0xff]
  %1973 = vrot.lane.b32.xlu0 %v1892, 64
  %v1974 = vpop.permute.xlu0 %1973
  %v1983 = vunpack.c.l.b16 %v1963
  %v1984 = vunpack.c.h.b16 %v1963
  %v1985 = vunpack.c.l.b16 %v1964
  %v1986 = vunpack.c.h.b16 %v1964
  %v1987 = vunpack.c.l.b16 %v1965
  %v1988 = vunpack.c.h.b16 %v1965
  %v1989 = vunpack.c.l.b16 %v1966
  %v1990 = vunpack.c.h.b16 %v1966
  %v1991 = vunpack.c.l.b16 %v1967
  %v1992 = vunpack.c.h.b16 %v1967
  %v1993 = vunpack.c.l.b16 %v1968
  %v1994 = vunpack.c.h.b16 %v1968
  %v1995 = vunpack.c.l.b16 %v1969
  %v1996 = vunpack.c.h.b16 %v1969
  %v1997 = vunpack.c.l.b16 %v1970
  %v1998 = vunpack.c.h.b16 %v1970
  %v1999 = vpack.c.b16 %v1985, %v1983
  %v2000 = vpack.c.b16 %v1986, %v1984
  %v2001 = vpack.c.b16 %v1989, %v1987
  %v2002 = vpack.c.b16 %v1990, %v1988
  %v2003 = vpack.c.b16 %v1993, %v1991
  %v2004 = vpack.c.b16 %v1994, %v1992
  %v2005 = vpack.c.b16 %v1997, %v1995
  %v2006 = vpack.c.b16 %v1998, %v1996
  %v2016 = vsel %vm502, %v1974, 0
  %2018 = vmatprep.subr.bf16.mxu0 %v2000
  %2019 = vmatpush1.bf16.msra.mxu0 %v1999
  %2020 = vmatprep.subr.bf16.mxu0 %v2002
  %2021 = vmatpush1.bf16.msra.mxu0 %v2001
  %2022 = vmatprep.subr.bf16.mxu0 %v2004
  %2023 = vmatpush1.bf16.msra.mxu0 %v2003
  %2024 = vmatprep.subr.bf16.mxu0 %v2006
  %2025 = vmatpush1.bf16.msra.mxu0 %v2005
  %2026 = vmatprep.subr.bf16.mxu0 0
  %2027 = vmatpush1.bf16.msra.mxu0 0
  %2028 = vmatprep.subr.bf16.mxu0 0
  %2029 = vmatpush1.bf16.msra.mxu0 0
  %2030 = vmatprep.subr.bf16.mxu0 0
  %2031 = vmatpush1.bf16.msra.mxu0 0
  %2032 = vmatprep.subr.bf16.mxu0 0
  %2033 = vmatpush1.bf16.msra.mxu0 0
  %2034 = vmatprep.subr.bf16.mxu0 0
  %2035 = vmatpush1.bf16.msra.mxu0 0
  %2036 = vmatprep.subr.bf16.mxu0 0
  %2037 = vmatpush1.bf16.msra.mxu0 0
  %2038 = vmatprep.subr.bf16.mxu0 0
  %2039 = vmatpush1.bf16.msra.mxu0 0
  %2040 = vmatprep.subr.bf16.mxu0 0
  %2041 = vmatpush1.bf16.msra.mxu0 0
  %2042 = vmatprep.subr.bf16.mxu0 0
  %2043 = vmatpush1.bf16.msra.mxu0 0
  %2044 = vmatprep.subr.bf16.mxu0 0
  %2045 = vmatpush1.bf16.msra.mxu0 0
  %2046 = vmatprep.subr.bf16.mxu0 0
  %2047 = vmatpush1.bf16.msra.mxu0 0
  %2048 = vmatprep.subr.bf16.mxu0 0
  %2049 = vmatpush1.bf16.msra.mxu0 0
  %2050 = vmatprep.mubr.bf16.mxu0 0
  %2051 = vmatmul.mubr.bf16.gmra.mrb[0].mxu0 %v2016
  %v2052 = vpop.f32.mrb[0].mxu0
  %v2053 = vadd.f32 %v1971, %v2052
  %v2054 = vpop.f32.mrb[0].mxu0
  %v2055 = vadd.f32 %v1972, %v2054
  %v2056 = vpop.f32.mrb[0].mxu0
  %v2057 = vpop.f32.mrb[0].mxu0
  %2058 = vdwg.mxu0
  %v2059 = vxor.u32 %v2053, 2147483648
  %v2060 = vxor.u32 %v2055, 2147483648
  %v2061 = vmul.f32 %v2059, 1.442695
  %v2062 = vpow.pop %v2061
  %v2063 = vmul.f32 %v2060, 1.442695
  %v2064 = vpow.pop %v2063
  %v2065 = vadd.f32 %v2062, 1.0
  %v2066 = vadd.f32 %v2064, 1.0
  %v2067 = vrcp.pop %v2065
  %v2068 = vmul.f32 1.0, %v2067
  %v2069 = vrcp.pop %v2066
  %v2070 = vmul.f32 1.0, %v2069
  %v2071 = vtanh.pop %v2055
  %v2072 = vmul.f32 %v2068, %v1889
  %v2073 = vmul.f32 %v2068, %v2071
  %2075 = vrot.lane.b32.xlu0 %v2073, 64
  %v2076 = vpop.permute.xlu0 %2075
  %v2078 = vadd.f32 %v2072, %v2076
  %v2079 = vtanh.pop %v2078
  %v2080 = vmul.f32 %v2070, %v2079
  %v2081 = vpack.c.bf16 %v2080, %v2080
  %v2082 = vld [vmem:[%s9] sm:$0xf]
  %v2083 = vld [vmem:[%s9 + $0x4] sm:$0xf]
  %v2084 = vld [vmem:[%s9 + $0x8] sm:$0xf]
  %v2085 = vld [vmem:[%s9 + $0xc] sm:$0xf]
  %v2086 = vld [vmem:[%s10] sm:$0x1]
  %v2088 = vlaneseq
  %v2089 = vshrl.u32 %v2088, 7
  %v2090 = vsub.s32 0, %v2089
  %v2091 = vrot.slane %v2086, %v2090
  %2094 = vrot.lane.b32.xlu0 %v2081, 32
  %v2095 = vpop.permute.xlu0 %2094
  %v2100 = vunpack.c.l.b16 %v2082
  %v2101 = vunpack.c.l.b16 %v2083
  %v2102 = vunpack.c.l.b16 %v2084
  %v2103 = vunpack.c.l.b16 %v2085
  %v2104 = vpack.c.b16 %v2101, %v2100
  %v2105 = vpack.c.b16 %v2103, %v2102
  %v2109 = vsel %vm215, %v2095, 0
  %2111 = vmatprep.subr.bf16.mxu0 0
  %2112 = vmatpush1.bf16.msra.mxu0 %v2104
  %2113 = vmatprep.subr.bf16.mxu0 0
  %2114 = vmatpush1.bf16.msra.mxu0 %v2105
  %2115 = vmatprep.subr.bf16.mxu0 0
  %2116 = vmatpush1.bf16.msra.mxu0 0
  %2117 = vmatprep.subr.bf16.mxu0 0
  %2118 = vmatpush1.bf16.msra.mxu0 0
  %2119 = vmatprep.subr.bf16.mxu0 0
  %2120 = vmatpush1.bf16.msra.mxu0 0
  %2121 = vmatprep.subr.bf16.mxu0 0
  %2122 = vmatpush1.bf16.msra.mxu0 0
  %2123 = vmatprep.subr.bf16.mxu0 0
  %2124 = vmatpush1.bf16.msra.mxu0 0
  %2125 = vmatprep.subr.bf16.mxu0 0
  %2126 = vmatpush1.bf16.msra.mxu0 0
  %2127 = vmatprep.subr.bf16.mxu0 0
  %2128 = vmatpush1.bf16.msra.mxu0 0
  %2129 = vmatprep.subr.bf16.mxu0 0
  %2130 = vmatpush1.bf16.msra.mxu0 0
  %2131 = vmatprep.subr.bf16.mxu0 0
  %2132 = vmatpush1.bf16.msra.mxu0 0
  %2133 = vmatprep.subr.bf16.mxu0 0
  %2134 = vmatpush1.bf16.msra.mxu0 0
  %2135 = vmatprep.subr.bf16.mxu0 0
  %2136 = vmatpush1.bf16.msra.mxu0 0
  %2137 = vmatprep.subr.bf16.mxu0 0
  %2138 = vmatpush1.bf16.msra.mxu0 0
  %2139 = vmatprep.subr.bf16.mxu0 0
  %2140 = vmatpush1.bf16.msra.mxu0 0
  %2141 = vmatprep.subr.bf16.mxu0 0
  %2142 = vmatpush1.bf16.msra.mxu0 0
  %2143 = vmatprep.mubr.bf16.mxu0 0
  %2144 = vmatmul.mubr.bf16.gmra.mrb[0].mxu0 %v2109
  %v2145 = vpop.f32.mrb[0].mxu0
  %v2146 = vadd.f32 %v2091, %v2145
  %v2147 = vpop.f32.mrb[0].mxu0
  %v2148 = vpop.f32.mrb[0].mxu0
  %v2149 = vpop.f32.mrb[0].mxu0
  %2150 = vdwg.mxu0
  %2151 = vst [vmem:[%s11 + $0x40] sm:$0xff] %v2146
  // Predicated region
  $region46: #{cnn_to_rnn_forward.1} parent=0 // pred_check
    _
  $region47: #{cnn_to_rnn_forward.1} parent=0 // pred_check_branch
    %2153 = sbr.rel (0) target = $region49
  $region48: #{cnn_to_rnn_forward.1} parent=0 // pred_region
    _
  $region49: #{cnn_to_rnn_forward.1} parent=0 // pred_fallthru
    _
  // Predicated region
  $region50: #{cnn_to_rnn_forward.1} parent=0 // pred_check
    _
  $region51: #{cnn_to_rnn_forward.1} parent=0 // pred_check_branch
    %2155 = sbr.rel (0) target = $region53
  $region52: #{cnn_to_rnn_forward.1} parent=0 // pred_region
    _
  $region53: #{cnn_to_rnn_forward.1} parent=0 // pred_fallthru
    _

</llo_original>
